<compile_context>
chip_gen: v5e
topology: v5e:2x2
jax: 0.10.0
libtpu: 0.0.40
codegen_flags: <defaults>
</compile_context>

<pallas_src>
import functools

import jax
import jax.numpy as jnp
from jax.experimental import pallas as pl
from jax.experimental.pallas import tpu as pltpu


_NT = (((1,), (1,)), ((), ()))   # contract last dim with last dim (A @ B^T)
_NN = (((1,), (0,)), ((), ()))   # ordinary matmul (A @ B)


def _layer_norm(z, g, b):
    mu = jnp.mean(z, axis=-1, keepdims=True)
    var = jnp.mean(jnp.square(z - mu), axis=-1, keepdims=True)
    return (z - mu) * jax.lax.rsqrt(var + 1e-5) * g + b


# ---------------------------------------------------------------------------
# Fused Extractor kernel: one batch element per grid step.
# ---------------------------------------------------------------------------
def _extractor_kernel(
    tgt_ref, mem_ref,
    sa_win_ref, sa_bin_ref, sa_wo_ref, sa_bo_ref,
    ca_wq_ref, ca_bq_ref, ca_wkv_ref, ca_bkv_ref, ca_wo_ref, ca_bo_ref,
    c1_w_ref, c1_b_ref, c2_w_ref, c2_b_ref,
    n1_w_ref, n1_b_ref, n2_w_ref, n2_b_ref, n3_w_ref, n3_b_ref,
    out_ref, attn_ref,
    *, nhead, ksize, no_residual):
    f32 = jnp.float32
    bf16 = jnp.bfloat16
    x0 = tgt_ref[0]                # (T, E) f32
    mem = mem_ref[0]               # (S, E) f32
    T, E = x0.shape
    hd = E // nhead
    scale = 1.0 / float(hd) ** 0.5

    def attention(q, k, v, wo_ref, bo_ref, need_weights):
        # q:(T,E) k,v:(S,E) f32.  Per-head static unroll; bf16 MXU operands,
        # f32 accumulation.  Per-head contexts are concatenated and the output
        # projection is ONE depth-E matmul (fused out-proj).
        qb = (q * scale).astype(bf16)
        kb = k.astype(bf16)
        vb = v.astype(bf16)
        ctx_heads = []
        attn_sum = None
        for h in range(nhead):
            sl = slice(h * hd, (h + 1) * hd)
            s = jax.lax.dot_general(qb[:, sl], kb[:, sl], _NT,
                                    preferred_element_type=f32)          # (T,S)
            s = s - jnp.max(s, axis=-1, keepdims=True)
            e = jnp.exp(s)
            denom = jnp.sum(e, axis=-1, keepdims=True)
            if need_weights:
                p = e / denom                      # exact probs (returned to caller)
                attn_sum = p if attn_sum is None else attn_sum + p
            else:
                p = e * pl.reciprocal(denom, approx=True)   # EUP slot, nearly free
            ctx_heads.append(
                jax.lax.dot_general(p.astype(bf16), vb[:, sl], _NN,
                                    preferred_element_type=f32))         # (T,hd)
        ctx = jnp.concatenate(ctx_heads, axis=-1)                        # (T,E)
        out = jax.lax.dot_general(ctx.astype(bf16), wo_ref[...], _NN,
                                  preferred_element_type=f32) + bo_ref[...]
        return out, attn_sum

    # --- self-attention + residual + norm1 (attention weights not needed) ---
    qkv = jax.lax.dot_general(x0.astype(bf16), sa_win_ref[...], _NN,
                              preferred_element_type=f32) + sa_bin_ref[...]  # (T,3E)
    sa_out, _ = attention(qkv[:, :E], qkv[:, E:2 * E], qkv[:, 2 * E:],
                          sa_wo_ref, sa_bo_ref, need_weights=False)
    x1 = _layer_norm(x0 + sa_out, n1_w_ref[...], n1_b_ref[...])

    # --- cross-attention + (optional) residual + norm2 ---
    q = jax.lax.dot_general(x1.astype(bf16), ca_wq_ref[...], _NN,
                            preferred_element_type=f32) + ca_bq_ref[...]     # (T,E)
    kv = jax.lax.dot_general(mem.astype(bf16), ca_wkv_ref[...], _NN,
                             preferred_element_type=f32) + ca_bkv_ref[...]   # (S,2E)
    ca_out, attn_sum = attention(q, kv[:, :E], kv[:, E:],
                                 ca_wo_ref, ca_bo_ref, need_weights=True)
    attn_ref[0] = attn_sum * (1.0 / nhead)        # head-averaged attention map
    x2 = _layer_norm(ca_out if no_residual else x1 + ca_out,
                     n2_w_ref[...], n2_b_ref[...])

    # --- conv block: Conv1d(k=9,pad=4) -> ReLU -> Conv1d(k=1) + res + norm3 ---
    # im2col: padded sequence kept as a register value; one deep matmul.
    pad = (ksize - 1) // 2
    zrows = jnp.zeros((pad, E), f32)
    xpad = jnp.concatenate([zrows, x2, zrows], axis=0)                  # (T+2p, E)
    cols = jnp.concatenate([xpad[k:k + T, :] for k in range(ksize)], axis=-1)
    h = jax.lax.dot_general(cols.astype(bf16), c1_w_ref[...], _NN,
                            preferred_element_type=f32) + c1_b_ref[...]  # (T,d_hid)
    h = jnp.maximum(h, 0.0)                                              # ReLU
    y = jax.lax.dot_general(h.astype(bf16), c2_w_ref[...], _NN,
                            preferred_element_type=f32) + c2_b_ref[...]  # (T,E)
    out_ref[0] = _layer_norm(x2 + y, n3_w_ref[...], n3_b_ref[...])


# ---------------------------------------------------------------------------
# Wrapper: single pallas_call for the whole forward.
# ---------------------------------------------------------------------------
def extractor_pallas(tgt, mem, params, *, nhead, no_residual=False):
    """tgt: (B,T,E), mem: (B,S,E) -> (out (B,T,E), attn (B,T,S))."""
    B, T, E = tgt.shape
    S = mem.shape[1]
    c1_w = params["conv1_w"]                 # (ksize*E, d_hid) bf16, pre-packed
    d_hid = c1_w.shape[1]
    ksize = c1_w.shape[0] // E
    sa, ca = params["self_attn"], params["cross_attn"]

    kern = functools.partial(_extractor_kernel, nhead=nhead, ksize=ksize,
                             no_residual=no_residual)

    def const(shape):
        # Constant block index across the grid -> weight stays resident in VMEM.
        return pl.BlockSpec(shape, lambda b, _s=len(shape): (0,) * _s)

    in_specs = [
        pl.BlockSpec((1, T, E), lambda b: (b, 0, 0)),      # tgt
        pl.BlockSpec((1, S, E), lambda b: (b, 0, 0)),      # memory
        const((E, 3 * E)), const((1, 3 * E)),              # self-attn in-proj (bf16/f32)
        const((E, E)), const((1, E)),                      # self-attn out-proj
        const((E, E)), const((1, E)),                      # cross-attn q-proj
        const((E, 2 * E)), const((1, 2 * E)),              # cross-attn kv-proj
        const((E, E)), const((1, E)),                      # cross-attn out-proj
        const((ksize * E, d_hid)), const((1, d_hid)),      # conv1 (im2col packed)
        const((d_hid, E)), const((1, E)),                  # conv2
        const((1, E)), const((1, E)),                      # norm1
        const((1, E)), const((1, E)),                      # norm2
        const((1, E)), const((1, E)),                      # norm3
    ]

    out, attn = pl.pallas_call(
        kern,
        out_shape=(jax.ShapeDtypeStruct((B, T, E), jnp.float32),
                   jax.ShapeDtypeStruct((B, T, S), jnp.float32)),
        grid=(B,),
        in_specs=in_specs,
        out_specs=(pl.BlockSpec((1, T, E), lambda b: (b, 0, 0)),
                   pl.BlockSpec((1, T, S), lambda b: (b, 0, 0))),
        compiler_params=pltpu.CompilerParams(
            dimension_semantics=("parallel",),
            vmem_limit_bytes=64 * 1024 * 1024),
    )(
        tgt, mem,
        sa["win_t"], sa["bin"], sa["wo_t"], sa["bo"],
        ca["wq_t"], ca["bq"], ca["wkv_t"], ca["bkv"], ca["wo_t"], ca["bo"],
        params["conv1_w"], params["conv1_b"], params["conv2_w"], params["conv2_b"],
        params["norm1_w"], params["norm1_b"],
        params["norm2_w"], params["norm2_b"],
        params["norm3_w"], params["norm3_b"],
    )
    return out, attn


def extractor_forward(tgt_tbe, mem_sbe, params, *, nhead, no_residual=False):
    """PyTorch-convention I/O: tgt (T,B,E), memory (S,B,E) -> ((T,B,E), (B,T,S))."""
    tgt = jnp.transpose(tgt_tbe, (1, 0, 2))
    mem = jnp.transpose(mem_sbe, (1, 0, 2))
    out, attn = extractor_pallas(tgt, mem, params, nhead=nhead,
                                 no_residual=no_residual)
    return jnp.transpose(out, (1, 0, 2)), attn


# ---------------------------------------------------------------------------
# Parameter construction (deterministic, synthetic).
# Matmul weights are pre-transposed/packed and stored as bf16 (kernel-ready);
# biases / LayerNorm params stay f32.
# ---------------------------------------------------------------------------
def init_params(key, d_model, d_hid, nhead, ksize=9):
    E = d_model
    bf = jnp.bfloat16
    ks = jax.random.split(key, 12)
    n = lambda k, shape, s=0.1: jax.random.normal(k, shape, jnp.float32) * s

    def mha_self(k0):
        kk = jax.random.split(k0, 4)
        in_w = n(kk[0], (3 * E, E))              # PyTorch in_proj_weight (3E,E)
        in_b = n(kk[1], (3 * E,), 0.02)
        out_w = n(kk[2], (E, E))                 # PyTorch out_proj.weight
        out_b = n(kk[3], (E,), 0.02)
        return dict(win_t=jnp.transpose(in_w).astype(bf),   # (E,3E) cols [Q|K|V]
                    bin=in_b.reshape(1, 3 * E),
                    wo_t=jnp.transpose(out_w).astype(bf),
                    bo=out_b.reshape(1, E))

    def mha_cross(k0):
        kk = jax.random.split(k0, 4)
        in_w = n(kk[0], (3 * E, E))
        in_b = n(kk[1], (3 * E,), 0.02)
        out_w = n(kk[2], (E, E))
        out_b = n(kk[3], (E,), 0.02)
        win_t = jnp.transpose(in_w)              # (E,3E)
        return dict(wq_t=win_t[:, :E].astype(bf), bq=in_b[:E].reshape(1, E),
                    wkv_t=win_t[:, E:].astype(bf), bkv=in_b[E:].reshape(1, 2 * E),
                    wo_t=jnp.transpose(out_w).astype(bf),
                    bo=out_b.reshape(1, E))

    conv1_w = n(ks[2], (d_hid, E, ksize))        # PyTorch Conv1d weight (d_hid,E,9)
    conv1_packed = jnp.transpose(conv1_w, (2, 1, 0)).reshape(ksize * E, d_hid)
    conv2_w = n(ks[4], (E, d_hid, 1))            # PyTorch Conv1d weight (E,d_hid,1)
    return {
        "self_attn": mha_self(ks[0]),
        "cross_attn": mha_cross(ks[1]),
        "conv1_w": conv1_packed.astype(bf),                  # (9E, d_hid)
        "conv1_b": n(ks[3], (d_hid,), 0.02).reshape(1, d_hid),
        "conv2_w": jnp.transpose(conv2_w[:, :, 0]).astype(bf),  # (d_hid, E)
        "conv2_b": n(ks[5], (E,), 0.02).reshape(1, E),
        "norm1_w": (1.0 + n(ks[6], (E,), 0.05)).reshape(1, E),
        "norm1_b": n(ks[7], (E,), 0.02).reshape(1, E),
        "norm2_w": (1.0 + n(ks[8], (E,), 0.05)).reshape(1, E),
        "norm2_b": n(ks[9], (E,), 0.02).reshape(1, E),
        "norm3_w": (1.0 + n(ks[10], (E,), 0.05)).reshape(1, E),
        "norm3_b": n(ks[11], (E,), 0.02).reshape(1, E),
    }


# ---------------------------------------------------------------------------
# Pure-JAX reference (f32 compute, same bf16-quantized weights).
# ---------------------------------------------------------------------------
def _mha_ref(q_in, kv_in, wq, bq, wk, bk, wv, bv, wo_t, bo, nhead):
    B, T, E = q_in.shape
    S = kv_in.shape[1]
    hd = E // nhead
    Q = q_in @ wq + bq
    K = kv_in @ wk + bk
    V = kv_in @ wv + bv
    Qh = Q.reshape(B, T, nhead, hd).transpose(0, 2, 1, 3) / jnp.sqrt(float(hd))
    Kh = K.reshape(B, S, nhead, hd).transpose(0, 2, 1, 3)
    Vh = V.reshape(B, S, nhead, hd).transpose(0, 2, 1, 3)
    s = jnp.einsum("bhtd,bhsd->bhts", Qh, Kh)
    p = jax.nn.softmax(s, axis=-1)
    ctx = jnp.einsum("bhts,bhsd->bhtd", p, Vh).transpose(0, 2, 1, 3).reshape(B, T, E)
    return ctx @ wo_t + bo, p.mean(axis=1)


def _add_ln_ref(x, r, g, b):
    z = x + r
    mu = z.mean(-1, keepdims=True)
    var = ((z - mu) ** 2).mean(-1, keepdims=True)
    return (z - mu) / jnp.sqrt(var + 1e-5) * g + b


def extractor_ref(tgt_tbe, mem_sbe, params, *, nhead, no_residual=False):
    f32 = jnp.float32
    tgt = jnp.transpose(tgt_tbe, (1, 0, 2))
    mem = jnp.transpose(mem_sbe, (1, 0, 2))
    E = tgt.shape[-1]
    sa = params["self_attn"]
    win = sa["win_t"].astype(f32)
    bin_ = sa["bin"]
    sa_out, _ = _mha_ref(tgt, tgt,
                         win[:, :E], bin_[:, :E],
                         win[:, E:2 * E], bin_[:, E:2 * E],
                         win[:, 2 * E:], bin_[:, 2 * E:],
                         sa["wo_t"].astype(f32), sa["bo"], nhead)
    x = _add_ln_ref(tgt, sa_out, params["norm1_w"], params["norm1_b"])
    ca = params["cross_attn"]
    wkv = ca["wkv_t"].astype(f32)
    bkv = ca["bkv"]
    ca_out, attn = _mha_ref(x, mem,
                            ca["wq_t"].astype(f32), ca["bq"],
                            wkv[:, :E], bkv[:, :E],
                            wkv[:, E:], bkv[:, E:],
                            ca["wo_t"].astype(f32), ca["bo"], nhead)
    if no_residual:
        x = _add_ln_ref(jnp.zeros_like(x), ca_out, params["norm2_w"], params["norm2_b"])
    else:
        x = _add_ln_ref(x, ca_out, params["norm2_w"], params["norm2_b"])
    B, T, _ = x.shape
    d_hid = params["conv1_b"].shape[-1]
    w1 = params["conv1_w"].astype(f32)
    ksize = w1.shape[0] // E
    w1 = w1.reshape(ksize, E, d_hid)
    pad = (ksize - 1) // 2
    xpad = jnp.pad(x, ((0, 0), (pad, pad), (0, 0)))
    h = sum(jnp.einsum("bte,eh->bth", xpad[:, k:k + T, :], w1[k])
            for k in range(ksize)) + params["conv1_b"]
    h = jnp.maximum(h, 0.0)
    y = jnp.einsum("bth,he->bte", h, params["conv2_w"].astype(f32)) + params["conv2_b"]
    out = _add_ln_ref(x, y, params["norm3_w"], params["norm3_b"])
    return jnp.transpose(out, (1, 0, 2)), attn


# ---------------------------------------------------------------------------
if __name__ == "__main__":
    T, S, B = 8, 16, 2               # tgt len, memory len, batch
    d_model, nhead, d_hid = 32, 4, 64

    key = jax.random.PRNGKey(0)
    k_tgt, k_mem, k_par = jax.random.split(key, 3)
    tgt = jax.random.normal(k_tgt, (T, B, d_model), jnp.float32)
    memory = jax.random.normal(k_mem, (S, B, d_model), jnp.float32)
    params = init_params(k_par, d_model, d_hid, nhead)

    out, attn = extractor_forward(tgt, memory, params, nhead=nhead)
    out = jax.block_until_ready(out)
    attn = jax.block_until_ready(attn)

    ref_out, ref_attn = extractor_ref(tgt, memory, params, nhead=nhead)
    assert out.shape == (T, B, d_model) and attn.shape == (B, T, S)
    assert bool(jnp.all(jnp.isfinite(out))) and bool(jnp.all(jnp.isfinite(attn)))
    assert bool(jnp.allclose(out, ref_out, atol=2e-2, rtol=2e-2))
    assert bool(jnp.allclose(attn, ref_attn, atol=2e-2, rtol=2e-2))

    print("KERNEL_OK")
</pallas_src>

<mosaic_0001>
module attributes {stable_mosaic.version = 11 : i64} {
  func.func @_extractor_kernel(%arg0: i32, %arg1: memref<1x8x32xf32, #tpu.memory_space<vmem>>, %arg2: memref<1x16x32xf32, #tpu.memory_space<vmem>>, %arg3: memref<32x96xbf16, #tpu.memory_space<vmem>>, %arg4: memref<1x96xf32, #tpu.memory_space<vmem>>, %arg5: memref<32x32xbf16, #tpu.memory_space<vmem>>, %arg6: memref<1x32xf32, #tpu.memory_space<vmem>>, %arg7: memref<32x32xbf16, #tpu.memory_space<vmem>>, %arg8: memref<1x32xf32, #tpu.memory_space<vmem>>, %arg9: memref<32x64xbf16, #tpu.memory_space<vmem>>, %arg10: memref<1x64xf32, #tpu.memory_space<vmem>>, %arg11: memref<32x32xbf16, #tpu.memory_space<vmem>>, %arg12: memref<1x32xf32, #tpu.memory_space<vmem>>, %arg13: memref<288x64xbf16, #tpu.memory_space<vmem>>, %arg14: memref<1x64xf32, #tpu.memory_space<vmem>>, %arg15: memref<64x32xbf16, #tpu.memory_space<vmem>>, %arg16: memref<1x32xf32, #tpu.memory_space<vmem>>, %arg17: memref<1x32xf32, #tpu.memory_space<vmem>>, %arg18: memref<1x32xf32, #tpu.memory_space<vmem>>, %arg19: memref<1x32xf32, #tpu.memory_space<vmem>>, %arg20: memref<1x32xf32, #tpu.memory_space<vmem>>, %arg21: memref<1x32xf32, #tpu.memory_space<vmem>>, %arg22: memref<1x32xf32, #tpu.memory_space<vmem>>, %arg23: memref<1x8x32xf32, #tpu.memory_space<vmem>>, %arg24: memref<1x8x16xf32, #tpu.memory_space<vmem>>) attributes {dimension_semantics = [#tpu.dimension_semantics<parallel>], iteration_bounds = array<i64: 2>, scalar_prefetch = 0 : i64, scratch_operands = 0 : i64, tpu.core_type = #tpu.core_type<tc>, window_params = [{transform_indices = @transform_0, window_bounds = array<i64: 1, 8, 32>}, {transform_indices = @transform_1, window_bounds = array<i64: 1, 16, 32>}, {pipeline_mode = #tpu.pipeline_mode<synchronous>, transform_indices = @transform_2, window_bounds = array<i64: 32, 96>}, {pipeline_mode = #tpu.pipeline_mode<synchronous>, transform_indices = @transform_3, window_bounds = array<i64: 1, 96>}, {pipeline_mode = #tpu.pipeline_mode<synchronous>, transform_indices = @transform_4, window_bounds = array<i64: 32, 32>}, {pipeline_mode = #tpu.pipeline_mode<synchronous>, transform_indices = @transform_5, window_bounds = array<i64: 1, 32>}, {pipeline_mode = #tpu.pipeline_mode<synchronous>, transform_indices = @transform_6, window_bounds = array<i64: 32, 32>}, {pipeline_mode = #tpu.pipeline_mode<synchronous>, transform_indices = @transform_7, window_bounds = array<i64: 1, 32>}, {pipeline_mode = #tpu.pipeline_mode<synchronous>, transform_indices = @transform_8, window_bounds = array<i64: 32, 64>}, {pipeline_mode = #tpu.pipeline_mode<synchronous>, transform_indices = @transform_9, window_bounds = array<i64: 1, 64>}, {pipeline_mode = #tpu.pipeline_mode<synchronous>, transform_indices = @transform_10, window_bounds = array<i64: 32, 32>}, {pipeline_mode = #tpu.pipeline_mode<synchronous>, transform_indices = @transform_11, window_bounds = array<i64: 1, 32>}, {pipeline_mode = #tpu.pipeline_mode<synchronous>, transform_indices = @transform_12, window_bounds = array<i64: 288, 64>}, {pipeline_mode = #tpu.pipeline_mode<synchronous>, transform_indices = @transform_13, window_bounds = array<i64: 1, 64>}, {pipeline_mode = #tpu.pipeline_mode<synchronous>, transform_indices = @transform_14, window_bounds = array<i64: 64, 32>}, {pipeline_mode = #tpu.pipeline_mode<synchronous>, transform_indices = @transform_15, window_bounds = array<i64: 1, 32>}, {pipeline_mode = #tpu.pipeline_mode<synchronous>, transform_indices = @transform_16, window_bounds = array<i64: 1, 32>}, {pipeline_mode = #tpu.pipeline_mode<synchronous>, transform_indices = @transform_17, window_bounds = array<i64: 1, 32>}, {pipeline_mode = #tpu.pipeline_mode<synchronous>, transform_indices = @transform_18, window_bounds = array<i64: 1, 32>}, {pipeline_mode = #tpu.pipeline_mode<synchronous>, transform_indices = @transform_19, window_bounds = array<i64: 1, 32>}, {pipeline_mode = #tpu.pipeline_mode<synchronous>, transform_indices = @transform_20, window_bounds = array<i64: 1, 32>}, {pipeline_mode = #tpu.pipeline_mode<synchronous>, transform_indices = @transform_21, window_bounds = array<i64: 1, 32>}, {transform_indices = @transform_22, window_bounds = array<i64: 1, 8, 32>}, {transform_indices = @transform_23, window_bounds = array<i64: 1, 8, 16>}]} {
    %c0 = arith.constant 0 : index
    %c0_0 = arith.constant 0 : index
    %c0_1 = arith.constant 0 : index
    %0 = vector.load %arg1[%c0, %c0_0, %c0_1] : memref<1x8x32xf32, #tpu.memory_space<vmem>>, vector<1x8x32xf32>
    %1 = vector.shape_cast %0 : vector<1x8x32xf32> to vector<8x32xf32>
    %c0_2 = arith.constant 0 : index
    %c0_3 = arith.constant 0 : index
    %c0_4 = arith.constant 0 : index
    %2 = vector.load %arg2[%c0_2, %c0_3, %c0_4] : memref<1x16x32xf32, #tpu.memory_space<vmem>>, vector<1x16x32xf32>
    %3 = vector.shape_cast %2 : vector<1x16x32xf32> to vector<16x32xf32>
    %4 = arith.truncf %1 : vector<8x32xf32> to vector<8x32xbf16>
    %c0_5 = arith.constant 0 : index
    %c0_6 = arith.constant 0 : index
    %5 = vector.load %arg3[%c0_5, %c0_6] : memref<32x96xbf16, #tpu.memory_space<vmem>>, vector<32x96xbf16>
    %cst = arith.constant dense<0.000000e+00> : vector<8x96xf32>
    %6 = tpu.matmul %4, %5, %cst {dimension_numbers = #tpu.dot_dimension_numbers<[1], [0], [0], [1], [0, 0, 1, 1], [], []>} : vector<8x32xbf16>, vector<32x96xbf16>, vector<8x96xf32> -> vector<8x96xf32>
    %c0_7 = arith.constant 0 : index
    %c0_8 = arith.constant 0 : index
    %7 = vector.load %arg4[%c0_7, %c0_8] : memref<1x96xf32, #tpu.memory_space<vmem>>, vector<1x96xf32>
    %8 = vector.broadcast %7 : vector<1x96xf32> to vector<8x96xf32>
    %9 = arith.addf %6, %8 : vector<8x96xf32>
    %10 = vector.extract_strided_slice %9 {offsets = [0, 0], sizes = [8, 32], strides = [1, 1]} : vector<8x96xf32> to vector<8x32xf32>
    %11 = vector.extract_strided_slice %9 {offsets = [0, 32], sizes = [8, 32], strides = [1, 1]} : vector<8x96xf32> to vector<8x32xf32>
    %12 = vector.extract_strided_slice %9 {offsets = [0, 64], sizes = [8, 32], strides = [1, 1]} : vector<8x96xf32> to vector<8x32xf32>
    %cst_9 = arith.constant 0.353553385 : f32
    %13 = vector.broadcast %cst_9 : f32 to vector<8x32xf32>
    %14 = arith.mulf %10, %13 : vector<8x32xf32>
    %15 = arith.truncf %14 : vector<8x32xf32> to vector<8x32xbf16>
    %16 = arith.truncf %11 : vector<8x32xf32> to vector<8x32xbf16>
    %17 = arith.truncf %12 : vector<8x32xf32> to vector<8x32xbf16>
    %18 = vector.extract_strided_slice %15 {offsets = [0, 0], sizes = [8, 8], strides = [1, 1]} : vector<8x32xbf16> to vector<8x8xbf16>
    %19 = vector.extract_strided_slice %16 {offsets = [0, 0], sizes = [8, 8], strides = [1, 1]} : vector<8x32xbf16> to vector<8x8xbf16>
    %cst_10 = arith.constant dense<0.000000e+00> : vector<8x8xf32>
    %20 = tpu.matmul %18, %19, %cst_10 {dimension_numbers = #tpu.dot_dimension_numbers<[1], [1], [0], [0], [0, 0, 1, 0], [], []>} : vector<8x8xbf16>, vector<8x8xbf16>, vector<8x8xf32> -> vector<8x8xf32>
    %cst_11 = arith.constant dense<0xFF800000> : vector<8xf32>
    %21 = vector.multi_reduction <maximumf>, %20, %cst_11 [1] : vector<8x8xf32> to vector<8xf32>
    %22 = vector.shape_cast %21 : vector<8xf32> to vector<8x1xf32>
    %23 = vector.broadcast %22 : vector<8x1xf32> to vector<8x8xf32>
    %24 = arith.subf %20, %23 : vector<8x8xf32>
    %25 = math.exp %24 : vector<8x8xf32>
    %cst_12 = arith.constant dense<0.000000e+00> : vector<8xf32>
    %26 = vector.multi_reduction <add>, %25, %cst_12 [1] : vector<8x8xf32> to vector<8xf32>
    %27 = vector.shape_cast %26 : vector<8xf32> to vector<8x1xf32>
    %28 = tpu.reciprocal %27 {approx = true} : vector<8x1xf32> -> vector<8x1xf32>
    %29 = vector.broadcast %28 : vector<8x1xf32> to vector<8x8xf32>
    %30 = arith.mulf %25, %29 : vector<8x8xf32>
    %31 = arith.truncf %30 : vector<8x8xf32> to vector<8x8xbf16>
    %32 = vector.extract_strided_slice %17 {offsets = [0, 0], sizes = [8, 8], strides = [1, 1]} : vector<8x32xbf16> to vector<8x8xbf16>
    %cst_13 = arith.constant dense<0.000000e+00> : vector<8x8xf32>
    %33 = tpu.matmul %31, %32, %cst_13 {dimension_numbers = #tpu.dot_dimension_numbers<[1], [0], [0], [1], [0, 0, 1, 1], [], []>} : vector<8x8xbf16>, vector<8x8xbf16>, vector<8x8xf32> -> vector<8x8xf32>
    %34 = vector.extract_strided_slice %15 {offsets = [0, 8], sizes = [8, 8], strides = [1, 1]} : vector<8x32xbf16> to vector<8x8xbf16>
    %35 = vector.extract_strided_slice %16 {offsets = [0, 8], sizes = [8, 8], strides = [1, 1]} : vector<8x32xbf16> to vector<8x8xbf16>
    %cst_14 = arith.constant dense<0.000000e+00> : vector<8x8xf32>
    %36 = tpu.matmul %34, %35, %cst_14 {dimension_numbers = #tpu.dot_dimension_numbers<[1], [1], [0], [0], [0, 0, 1, 0], [], []>} : vector<8x8xbf16>, vector<8x8xbf16>, vector<8x8xf32> -> vector<8x8xf32>
    %cst_15 = arith.constant dense<0xFF800000> : vector<8xf32>
    %37 = vector.multi_reduction <maximumf>, %36, %cst_15 [1] : vector<8x8xf32> to vector<8xf32>
    %38 = vector.shape_cast %37 : vector<8xf32> to vector<8x1xf32>
    %39 = vector.broadcast %38 : vector<8x1xf32> to vector<8x8xf32>
    %40 = arith.subf %36, %39 : vector<8x8xf32>
    %41 = math.exp %40 : vector<8x8xf32>
    %cst_16 = arith.constant dense<0.000000e+00> : vector<8xf32>
    %42 = vector.multi_reduction <add>, %41, %cst_16 [1] : vector<8x8xf32> to vector<8xf32>
    %43 = vector.shape_cast %42 : vector<8xf32> to vector<8x1xf32>
    %44 = tpu.reciprocal %43 {approx = true} : vector<8x1xf32> -> vector<8x1xf32>
    %45 = vector.broadcast %44 : vector<8x1xf32> to vector<8x8xf32>
    %46 = arith.mulf %41, %45 : vector<8x8xf32>
    %47 = arith.truncf %46 : vector<8x8xf32> to vector<8x8xbf16>
    %48 = vector.extract_strided_slice %17 {offsets = [0, 8], sizes = [8, 8], strides = [1, 1]} : vector<8x32xbf16> to vector<8x8xbf16>
    %cst_17 = arith.constant dense<0.000000e+00> : vector<8x8xf32>
    %49 = tpu.matmul %47, %48, %cst_17 {dimension_numbers = #tpu.dot_dimension_numbers<[1], [0], [0], [1], [0, 0, 1, 1], [], []>} : vector<8x8xbf16>, vector<8x8xbf16>, vector<8x8xf32> -> vector<8x8xf32>
    %50 = vector.extract_strided_slice %15 {offsets = [0, 16], sizes = [8, 8], strides = [1, 1]} : vector<8x32xbf16> to vector<8x8xbf16>
    %51 = vector.extract_strided_slice %16 {offsets = [0, 16], sizes = [8, 8], strides = [1, 1]} : vector<8x32xbf16> to vector<8x8xbf16>
    %cst_18 = arith.constant dense<0.000000e+00> : vector<8x8xf32>
    %52 = tpu.matmul %50, %51, %cst_18 {dimension_numbers = #tpu.dot_dimension_numbers<[1], [1], [0], [0], [0, 0, 1, 0], [], []>} : vector<8x8xbf16>, vector<8x8xbf16>, vector<8x8xf32> -> vector<8x8xf32>
    %cst_19 = arith.constant dense<0xFF800000> : vector<8xf32>
    %53 = vector.multi_reduction <maximumf>, %52, %cst_19 [1] : vector<8x8xf32> to vector<8xf32>
    %54 = vector.shape_cast %53 : vector<8xf32> to vector<8x1xf32>
    %55 = vector.broadcast %54 : vector<8x1xf32> to vector<8x8xf32>
    %56 = arith.subf %52, %55 : vector<8x8xf32>
    %57 = math.exp %56 : vector<8x8xf32>
    %cst_20 = arith.constant dense<0.000000e+00> : vector<8xf32>
    %58 = vector.multi_reduction <add>, %57, %cst_20 [1] : vector<8x8xf32> to vector<8xf32>
    %59 = vector.shape_cast %58 : vector<8xf32> to vector<8x1xf32>
    %60 = tpu.reciprocal %59 {approx = true} : vector<8x1xf32> -> vector<8x1xf32>
    %61 = vector.broadcast %60 : vector<8x1xf32> to vector<8x8xf32>
    %62 = arith.mulf %57, %61 : vector<8x8xf32>
    %63 = arith.truncf %62 : vector<8x8xf32> to vector<8x8xbf16>
    %64 = vector.extract_strided_slice %17 {offsets = [0, 16], sizes = [8, 8], strides = [1, 1]} : vector<8x32xbf16> to vector<8x8xbf16>
    %cst_21 = arith.constant dense<0.000000e+00> : vector<8x8xf32>
    %65 = tpu.matmul %63, %64, %cst_21 {dimension_numbers = #tpu.dot_dimension_numbers<[1], [0], [0], [1], [0, 0, 1, 1], [], []>} : vector<8x8xbf16>, vector<8x8xbf16>, vector<8x8xf32> -> vector<8x8xf32>
    %66 = vector.extract_strided_slice %15 {offsets = [0, 24], sizes = [8, 8], strides = [1, 1]} : vector<8x32xbf16> to vector<8x8xbf16>
    %67 = vector.extract_strided_slice %16 {offsets = [0, 24], sizes = [8, 8], strides = [1, 1]} : vector<8x32xbf16> to vector<8x8xbf16>
    %cst_22 = arith.constant dense<0.000000e+00> : vector<8x8xf32>
    %68 = tpu.matmul %66, %67, %cst_22 {dimension_numbers = #tpu.dot_dimension_numbers<[1], [1], [0], [0], [0, 0, 1, 0], [], []>} : vector<8x8xbf16>, vector<8x8xbf16>, vector<8x8xf32> -> vector<8x8xf32>
    %cst_23 = arith.constant dense<0xFF800000> : vector<8xf32>
    %69 = vector.multi_reduction <maximumf>, %68, %cst_23 [1] : vector<8x8xf32> to vector<8xf32>
    %70 = vector.shape_cast %69 : vector<8xf32> to vector<8x1xf32>
    %71 = vector.broadcast %70 : vector<8x1xf32> to vector<8x8xf32>
    %72 = arith.subf %68, %71 : vector<8x8xf32>
    %73 = math.exp %72 : vector<8x8xf32>
    %cst_24 = arith.constant dense<0.000000e+00> : vector<8xf32>
    %74 = vector.multi_reduction <add>, %73, %cst_24 [1] : vector<8x8xf32> to vector<8xf32>
    %75 = vector.shape_cast %74 : vector<8xf32> to vector<8x1xf32>
    %76 = tpu.reciprocal %75 {approx = true} : vector<8x1xf32> -> vector<8x1xf32>
    %77 = vector.broadcast %76 : vector<8x1xf32> to vector<8x8xf32>
    %78 = arith.mulf %73, %77 : vector<8x8xf32>
    %79 = arith.truncf %78 : vector<8x8xf32> to vector<8x8xbf16>
    %80 = vector.extract_strided_slice %17 {offsets = [0, 24], sizes = [8, 8], strides = [1, 1]} : vector<8x32xbf16> to vector<8x8xbf16>
    %cst_25 = arith.constant dense<0.000000e+00> : vector<8x8xf32>
    %81 = tpu.matmul %79, %80, %cst_25 {dimension_numbers = #tpu.dot_dimension_numbers<[1], [0], [0], [1], [0, 0, 1, 1], [], []>} : vector<8x8xbf16>, vector<8x8xbf16>, vector<8x8xf32> -> vector<8x8xf32>
    %82 = tpu.concatenate %33, %49, %65, %81 in 1 : vector<8x8xf32>, vector<8x8xf32>, vector<8x8xf32>, vector<8x8xf32> -> vector<8x32xf32>
    %83 = arith.truncf %82 : vector<8x32xf32> to vector<8x32xbf16>
    %c0_26 = arith.constant 0 : index
    %c0_27 = arith.constant 0 : index
    %84 = vector.load %arg5[%c0_26, %c0_27] : memref<32x32xbf16, #tpu.memory_space<vmem>>, vector<32x32xbf16>
    %cst_28 = arith.constant dense<0.000000e+00> : vector<8x32xf32>
    %85 = tpu.matmul %83, %84, %cst_28 {dimension_numbers = #tpu.dot_dimension_numbers<[1], [0], [0], [1], [0, 0, 1, 1], [], []>} : vector<8x32xbf16>, vector<32x32xbf16>, vector<8x32xf32> -> vector<8x32xf32>
    %c0_29 = arith.constant 0 : index
    %c0_30 = arith.constant 0 : index
    %86 = vector.load %arg6[%c0_29, %c0_30] : memref<1x32xf32, #tpu.memory_space<vmem>>, vector<1x32xf32>
    %87 = vector.broadcast %86 : vector<1x32xf32> to vector<8x32xf32>
    %88 = arith.addf %85, %87 : vector<8x32xf32>
    %89 = arith.addf %1, %88 : vector<8x32xf32>
    %c0_31 = arith.constant 0 : index
    %c0_32 = arith.constant 0 : index
    %90 = vector.load %arg17[%c0_31, %c0_32] : memref<1x32xf32, #tpu.memory_space<vmem>>, vector<1x32xf32>
    %c0_33 = arith.constant 0 : index
    %c0_34 = arith.constant 0 : index
    %91 = vector.load %arg18[%c0_33, %c0_34] : memref<1x32xf32, #tpu.memory_space<vmem>>, vector<1x32xf32>
    %cst_35 = arith.constant dense<0.000000e+00> : vector<8xf32>
    %92 = vector.multi_reduction <add>, %89, %cst_35 [1] : vector<8x32xf32> to vector<8xf32>
    %93 = vector.shape_cast %92 : vector<8xf32> to vector<8x1xf32>
    %cst_36 = arith.constant 3.200000e+01 : f32
    %94 = vector.broadcast %cst_36 : f32 to vector<8x1xf32>
    %95 = arith.divf %93, %94 : vector<8x1xf32>
    %96 = vector.broadcast %95 : vector<8x1xf32> to vector<8x32xf32>
    %97 = arith.subf %89, %96 : vector<8x32xf32>
    %98 = arith.mulf %97, %97 : vector<8x32xf32>
    %cst_37 = arith.constant dense<0.000000e+00> : vector<8xf32>
    %99 = vector.multi_reduction <add>, %98, %cst_37 [1] : vector<8x32xf32> to vector<8xf32>
    %100 = vector.shape_cast %99 : vector<8xf32> to vector<8x1xf32>
    %cst_38 = arith.constant 3.200000e+01 : f32
    %101 = vector.broadcast %cst_38 : f32 to vector<8x1xf32>
    %102 = arith.divf %100, %101 : vector<8x1xf32>
    %103 = vector.broadcast %95 : vector<8x1xf32> to vector<8x32xf32>
    %104 = arith.subf %89, %103 : vector<8x32xf32>
    %cst_39 = arith.constant 9.99999974E-6 : f32
    %105 = vector.broadcast %cst_39 : f32 to vector<8x1xf32>
    %106 = arith.addf %102, %105 : vector<8x1xf32>
    %107 = math.rsqrt %106 : vector<8x1xf32>
    %108 = vector.broadcast %107 : vector<8x1xf32> to vector<8x32xf32>
    %109 = arith.mulf %104, %108 : vector<8x32xf32>
    %110 = vector.broadcast %90 : vector<1x32xf32> to vector<8x32xf32>
    %111 = arith.mulf %109, %110 : vector<8x32xf32>
    %112 = vector.broadcast %91 : vector<1x32xf32> to vector<8x32xf32>
    %113 = arith.addf %111, %112 : vector<8x32xf32>
    %114 = arith.truncf %113 : vector<8x32xf32> to vector<8x32xbf16>
    %c0_40 = arith.constant 0 : index
    %c0_41 = arith.constant 0 : index
    %115 = vector.load %arg7[%c0_40, %c0_41] : memref<32x32xbf16, #tpu.memory_space<vmem>>, vector<32x32xbf16>
    %cst_42 = arith.constant dense<0.000000e+00> : vector<8x32xf32>
    %116 = tpu.matmul %114, %115, %cst_42 {dimension_numbers = #tpu.dot_dimension_numbers<[1], [0], [0], [1], [0, 0, 1, 1], [], []>} : vector<8x32xbf16>, vector<32x32xbf16>, vector<8x32xf32> -> vector<8x32xf32>
    %c0_43 = arith.constant 0 : index
    %c0_44 = arith.constant 0 : index
    %117 = vector.load %arg8[%c0_43, %c0_44] : memref<1x32xf32, #tpu.memory_space<vmem>>, vector<1x32xf32>
    %118 = vector.broadcast %117 : vector<1x32xf32> to vector<8x32xf32>
    %119 = arith.addf %116, %118 : vector<8x32xf32>
    %120 = arith.truncf %3 : vector<16x32xf32> to vector<16x32xbf16>
    %c0_45 = arith.constant 0 : index
    %c0_46 = arith.constant 0 : index
    %121 = vector.load %arg9[%c0_45, %c0_46] : memref<32x64xbf16, #tpu.memory_space<vmem>>, vector<32x64xbf16>
    %cst_47 = arith.constant dense<0.000000e+00> : vector<16x64xf32>
    %122 = tpu.matmul %120, %121, %cst_47 {dimension_numbers = #tpu.dot_dimension_numbers<[1], [0], [0], [1], [0, 0, 1, 1], [], []>} : vector<16x32xbf16>, vector<32x64xbf16>, vector<16x64xf32> -> vector<16x64xf32>
    %c0_48 = arith.constant 0 : index
    %c0_49 = arith.constant 0 : index
    %123 = vector.load %arg10[%c0_48, %c0_49] : memref<1x64xf32, #tpu.memory_space<vmem>>, vector<1x64xf32>
    %124 = vector.broadcast %123 : vector<1x64xf32> to vector<16x64xf32>
    %125 = arith.addf %122, %124 : vector<16x64xf32>
    %126 = vector.extract_strided_slice %125 {offsets = [0, 0], sizes = [16, 32], strides = [1, 1]} : vector<16x64xf32> to vector<16x32xf32>
    %127 = vector.extract_strided_slice %125 {offsets = [0, 32], sizes = [16, 32], strides = [1, 1]} : vector<16x64xf32> to vector<16x32xf32>
    %cst_50 = arith.constant 0.353553385 : f32
    %128 = vector.broadcast %cst_50 : f32 to vector<8x32xf32>
    %129 = arith.mulf %119, %128 : vector<8x32xf32>
    %130 = arith.truncf %129 : vector<8x32xf32> to vector<8x32xbf16>
    %131 = arith.truncf %126 : vector<16x32xf32> to vector<16x32xbf16>
    %132 = arith.truncf %127 : vector<16x32xf32> to vector<16x32xbf16>
    %133 = vector.extract_strided_slice %130 {offsets = [0, 0], sizes = [8, 8], strides = [1, 1]} : vector<8x32xbf16> to vector<8x8xbf16>
    %134 = vector.extract_strided_slice %131 {offsets = [0, 0], sizes = [16, 8], strides = [1, 1]} : vector<16x32xbf16> to vector<16x8xbf16>
    %cst_51 = arith.constant dense<0.000000e+00> : vector<8x16xf32>
    %135 = tpu.matmul %133, %134, %cst_51 {dimension_numbers = #tpu.dot_dimension_numbers<[1], [1], [0], [0], [0, 0, 1, 0], [], []>} : vector<8x8xbf16>, vector<16x8xbf16>, vector<8x16xf32> -> vector<8x16xf32>
    %cst_52 = arith.constant dense<0xFF800000> : vector<8xf32>
    %136 = vector.multi_reduction <maximumf>, %135, %cst_52 [1] : vector<8x16xf32> to vector<8xf32>
    %137 = vector.shape_cast %136 : vector<8xf32> to vector<8x1xf32>
    %138 = vector.broadcast %137 : vector<8x1xf32> to vector<8x16xf32>
    %139 = arith.subf %135, %138 : vector<8x16xf32>
    %140 = math.exp %139 : vector<8x16xf32>
    %cst_53 = arith.constant dense<0.000000e+00> : vector<8xf32>
    %141 = vector.multi_reduction <add>, %140, %cst_53 [1] : vector<8x16xf32> to vector<8xf32>
    %142 = vector.shape_cast %141 : vector<8xf32> to vector<8x1xf32>
    %143 = vector.broadcast %142 : vector<8x1xf32> to vector<8x16xf32>
    %144 = arith.divf %140, %143 : vector<8x16xf32>
    %145 = arith.truncf %144 : vector<8x16xf32> to vector<8x16xbf16>
    %146 = vector.extract_strided_slice %132 {offsets = [0, 0], sizes = [16, 8], strides = [1, 1]} : vector<16x32xbf16> to vector<16x8xbf16>
    %cst_54 = arith.constant dense<0.000000e+00> : vector<8x8xf32>
    %147 = tpu.matmul %145, %146, %cst_54 {dimension_numbers = #tpu.dot_dimension_numbers<[1], [0], [0], [1], [0, 0, 1, 1], [], []>} : vector<8x16xbf16>, vector<16x8xbf16>, vector<8x8xf32> -> vector<8x8xf32>
    %148 = vector.extract_strided_slice %130 {offsets = [0, 8], sizes = [8, 8], strides = [1, 1]} : vector<8x32xbf16> to vector<8x8xbf16>
    %149 = vector.extract_strided_slice %131 {offsets = [0, 8], sizes = [16, 8], strides = [1, 1]} : vector<16x32xbf16> to vector<16x8xbf16>
    %cst_55 = arith.constant dense<0.000000e+00> : vector<8x16xf32>
    %150 = tpu.matmul %148, %149, %cst_55 {dimension_numbers = #tpu.dot_dimension_numbers<[1], [1], [0], [0], [0, 0, 1, 0], [], []>} : vector<8x8xbf16>, vector<16x8xbf16>, vector<8x16xf32> -> vector<8x16xf32>
    %cst_56 = arith.constant dense<0xFF800000> : vector<8xf32>
    %151 = vector.multi_reduction <maximumf>, %150, %cst_56 [1] : vector<8x16xf32> to vector<8xf32>
    %152 = vector.shape_cast %151 : vector<8xf32> to vector<8x1xf32>
    %153 = vector.broadcast %152 : vector<8x1xf32> to vector<8x16xf32>
    %154 = arith.subf %150, %153 : vector<8x16xf32>
    %155 = math.exp %154 : vector<8x16xf32>
    %cst_57 = arith.constant dense<0.000000e+00> : vector<8xf32>
    %156 = vector.multi_reduction <add>, %155, %cst_57 [1] : vector<8x16xf32> to vector<8xf32>
    %157 = vector.shape_cast %156 : vector<8xf32> to vector<8x1xf32>
    %158 = vector.broadcast %157 : vector<8x1xf32> to vector<8x16xf32>
    %159 = arith.divf %155, %158 : vector<8x16xf32>
    %160 = arith.addf %144, %159 : vector<8x16xf32>
    %161 = arith.truncf %159 : vector<8x16xf32> to vector<8x16xbf16>
    %162 = vector.extract_strided_slice %132 {offsets = [0, 8], sizes = [16, 8], strides = [1, 1]} : vector<16x32xbf16> to vector<16x8xbf16>
    %cst_58 = arith.constant dense<0.000000e+00> : vector<8x8xf32>
    %163 = tpu.matmul %161, %162, %cst_58 {dimension_numbers = #tpu.dot_dimension_numbers<[1], [0], [0], [1], [0, 0, 1, 1], [], []>} : vector<8x16xbf16>, vector<16x8xbf16>, vector<8x8xf32> -> vector<8x8xf32>
    %164 = vector.extract_strided_slice %130 {offsets = [0, 16], sizes = [8, 8], strides = [1, 1]} : vector<8x32xbf16> to vector<8x8xbf16>
    %165 = vector.extract_strided_slice %131 {offsets = [0, 16], sizes = [16, 8], strides = [1, 1]} : vector<16x32xbf16> to vector<16x8xbf16>
    %cst_59 = arith.constant dense<0.000000e+00> : vector<8x16xf32>
    %166 = tpu.matmul %164, %165, %cst_59 {dimension_numbers = #tpu.dot_dimension_numbers<[1], [1], [0], [0], [0, 0, 1, 0], [], []>} : vector<8x8xbf16>, vector<16x8xbf16>, vector<8x16xf32> -> vector<8x16xf32>
    %cst_60 = arith.constant dense<0xFF800000> : vector<8xf32>
    %167 = vector.multi_reduction <maximumf>, %166, %cst_60 [1] : vector<8x16xf32> to vector<8xf32>
    %168 = vector.shape_cast %167 : vector<8xf32> to vector<8x1xf32>
    %169 = vector.broadcast %168 : vector<8x1xf32> to vector<8x16xf32>
    %170 = arith.subf %166, %169 : vector<8x16xf32>
    %171 = math.exp %170 : vector<8x16xf32>
    %cst_61 = arith.constant dense<0.000000e+00> : vector<8xf32>
    %172 = vector.multi_reduction <add>, %171, %cst_61 [1] : vector<8x16xf32> to vector<8xf32>
    %173 = vector.shape_cast %172 : vector<8xf32> to vector<8x1xf32>
    %174 = vector.broadcast %173 : vector<8x1xf32> to vector<8x16xf32>
    %175 = arith.divf %171, %174 : vector<8x16xf32>
    %176 = arith.addf %160, %175 : vector<8x16xf32>
    %177 = arith.truncf %175 : vector<8x16xf32> to vector<8x16xbf16>
    %178 = vector.extract_strided_slice %132 {offsets = [0, 16], sizes = [16, 8], strides = [1, 1]} : vector<16x32xbf16> to vector<16x8xbf16>
    %cst_62 = arith.constant dense<0.000000e+00> : vector<8x8xf32>
    %179 = tpu.matmul %177, %178, %cst_62 {dimension_numbers = #tpu.dot_dimension_numbers<[1], [0], [0], [1], [0, 0, 1, 1], [], []>} : vector<8x16xbf16>, vector<16x8xbf16>, vector<8x8xf32> -> vector<8x8xf32>
    %180 = vector.extract_strided_slice %130 {offsets = [0, 24], sizes = [8, 8], strides = [1, 1]} : vector<8x32xbf16> to vector<8x8xbf16>
    %181 = vector.extract_strided_slice %131 {offsets = [0, 24], sizes = [16, 8], strides = [1, 1]} : vector<16x32xbf16> to vector<16x8xbf16>
    %cst_63 = arith.constant dense<0.000000e+00> : vector<8x16xf32>
    %182 = tpu.matmul %180, %181, %cst_63 {dimension_numbers = #tpu.dot_dimension_numbers<[1], [1], [0], [0], [0, 0, 1, 0], [], []>} : vector<8x8xbf16>, vector<16x8xbf16>, vector<8x16xf32> -> vector<8x16xf32>
    %cst_64 = arith.constant dense<0xFF800000> : vector<8xf32>
    %183 = vector.multi_reduction <maximumf>, %182, %cst_64 [1] : vector<8x16xf32> to vector<8xf32>
    %184 = vector.shape_cast %183 : vector<8xf32> to vector<8x1xf32>
    %185 = vector.broadcast %184 : vector<8x1xf32> to vector<8x16xf32>
    %186 = arith.subf %182, %185 : vector<8x16xf32>
    %187 = math.exp %186 : vector<8x16xf32>
    %cst_65 = arith.constant dense<0.000000e+00> : vector<8xf32>
    %188 = vector.multi_reduction <add>, %187, %cst_65 [1] : vector<8x16xf32> to vector<8xf32>
    %189 = vector.shape_cast %188 : vector<8xf32> to vector<8x1xf32>
    %190 = vector.broadcast %189 : vector<8x1xf32> to vector<8x16xf32>
    %191 = arith.divf %187, %190 : vector<8x16xf32>
    %192 = arith.addf %176, %191 : vector<8x16xf32>
    %193 = arith.truncf %191 : vector<8x16xf32> to vector<8x16xbf16>
    %194 = vector.extract_strided_slice %132 {offsets = [0, 24], sizes = [16, 8], strides = [1, 1]} : vector<16x32xbf16> to vector<16x8xbf16>
    %cst_66 = arith.constant dense<0.000000e+00> : vector<8x8xf32>
    %195 = tpu.matmul %193, %194, %cst_66 {dimension_numbers = #tpu.dot_dimension_numbers<[1], [0], [0], [1], [0, 0, 1, 1], [], []>} : vector<8x16xbf16>, vector<16x8xbf16>, vector<8x8xf32> -> vector<8x8xf32>
    %196 = tpu.concatenate %147, %163, %179, %195 in 1 : vector<8x8xf32>, vector<8x8xf32>, vector<8x8xf32>, vector<8x8xf32> -> vector<8x32xf32>
    %197 = arith.truncf %196 : vector<8x32xf32> to vector<8x32xbf16>
    %c0_67 = arith.constant 0 : index
    %c0_68 = arith.constant 0 : index
    %198 = vector.load %arg11[%c0_67, %c0_68] : memref<32x32xbf16, #tpu.memory_space<vmem>>, vector<32x32xbf16>
    %cst_69 = arith.constant dense<0.000000e+00> : vector<8x32xf32>
    %199 = tpu.matmul %197, %198, %cst_69 {dimension_numbers = #tpu.dot_dimension_numbers<[1], [0], [0], [1], [0, 0, 1, 1], [], []>} : vector<8x32xbf16>, vector<32x32xbf16>, vector<8x32xf32> -> vector<8x32xf32>
    %c0_70 = arith.constant 0 : index
    %c0_71 = arith.constant 0 : index
    %200 = vector.load %arg12[%c0_70, %c0_71] : memref<1x32xf32, #tpu.memory_space<vmem>>, vector<1x32xf32>
    %201 = vector.broadcast %200 : vector<1x32xf32> to vector<8x32xf32>
    %202 = arith.addf %199, %201 : vector<8x32xf32>
    %cst_72 = arith.constant 2.500000e-01 : f32
    %203 = vector.broadcast %cst_72 : f32 to vector<8x16xf32>
    %204 = arith.mulf %192, %203 : vector<8x16xf32>
    %c0_73 = arith.constant 0 : index
    %c0_74 = arith.constant 0 : index
    %c0_75 = arith.constant 0 : index
    %205 = vector.load %arg24[%c0_73, %c0_74, %c0_75] : memref<1x8x16xf32, #tpu.memory_space<vmem>>, vector<1x8x16xf32>
    %206 = vector.shape_cast %205 : vector<1x8x16xf32> to vector<8x16xf32>
    %207 = vector.shape_cast %204 : vector<8x16xf32> to vector<1x8x16xf32>
    tpu.vector_store %arg24[%c0_73, %c0_74, %c0_75], %207 {strides = array<i32>} : memref<1x8x16xf32, #tpu.memory_space<vmem>>, vector<1x8x16xf32>,
    %208 = arith.addf %113, %202 : vector<8x32xf32>
    %c0_76 = arith.constant 0 : index
    %c0_77 = arith.constant 0 : index
    %209 = vector.load %arg19[%c0_76, %c0_77] : memref<1x32xf32, #tpu.memory_space<vmem>>, vector<1x32xf32>
    %c0_78 = arith.constant 0 : index
    %c0_79 = arith.constant 0 : index
    %210 = vector.load %arg20[%c0_78, %c0_79] : memref<1x32xf32, #tpu.memory_space<vmem>>, vector<1x32xf32>
    %cst_80 = arith.constant dense<0.000000e+00> : vector<8xf32>
    %211 = vector.multi_reduction <add>, %208, %cst_80 [1] : vector<8x32xf32> to vector<8xf32>
    %212 = vector.shape_cast %211 : vector<8xf32> to vector<8x1xf32>
    %cst_81 = arith.constant 3.200000e+01 : f32
    %213 = vector.broadcast %cst_81 : f32 to vector<8x1xf32>
    %214 = arith.divf %212, %213 : vector<8x1xf32>
    %215 = vector.broadcast %214 : vector<8x1xf32> to vector<8x32xf32>
    %216 = arith.subf %208, %215 : vector<8x32xf32>
    %217 = arith.mulf %216, %216 : vector<8x32xf32>
    %cst_82 = arith.constant dense<0.000000e+00> : vector<8xf32>
    %218 = vector.multi_reduction <add>, %217, %cst_82 [1] : vector<8x32xf32> to vector<8xf32>
    %219 = vector.shape_cast %218 : vector<8xf32> to vector<8x1xf32>
    %cst_83 = arith.constant 3.200000e+01 : f32
    %220 = vector.broadcast %cst_83 : f32 to vector<8x1xf32>
    %221 = arith.divf %219, %220 : vector<8x1xf32>
    %222 = vector.broadcast %214 : vector<8x1xf32> to vector<8x32xf32>
    %223 = arith.subf %208, %222 : vector<8x32xf32>
    %cst_84 = arith.constant 9.99999974E-6 : f32
    %224 = vector.broadcast %cst_84 : f32 to vector<8x1xf32>
    %225 = arith.addf %221, %224 : vector<8x1xf32>
    %226 = math.rsqrt %225 : vector<8x1xf32>
    %227 = vector.broadcast %226 : vector<8x1xf32> to vector<8x32xf32>
    %228 = arith.mulf %223, %227 : vector<8x32xf32>
    %229 = vector.broadcast %209 : vector<1x32xf32> to vector<8x32xf32>
    %230 = arith.mulf %228, %229 : vector<8x32xf32>
    %231 = vector.broadcast %210 : vector<1x32xf32> to vector<8x32xf32>
    %232 = arith.addf %230, %231 : vector<8x32xf32>
    %cst_85 = arith.constant 0.000000e+00 : f32
    %233 = vector.broadcast %cst_85 : f32 to vector<4x32xf32>
    %234 = tpu.concatenate %233, %232, %233 in 0 : vector<4x32xf32>, vector<8x32xf32>, vector<4x32xf32> -> vector<16x32xf32>
    %235 = vector.extract_strided_slice %234 {offsets = [0, 0], sizes = [8, 32], strides = [1, 1]} : vector<16x32xf32> to vector<8x32xf32>
    %236 = vector.extract_strided_slice %234 {offsets = [1, 0], sizes = [8, 32], strides = [1, 1]} : vector<16x32xf32> to vector<8x32xf32>
    %237 = vector.extract_strided_slice %234 {offsets = [2, 0], sizes = [8, 32], strides = [1, 1]} : vector<16x32xf32> to vector<8x32xf32>
    %238 = vector.extract_strided_slice %234 {offsets = [3, 0], sizes = [8, 32], strides = [1, 1]} : vector<16x32xf32> to vector<8x32xf32>
    %239 = vector.extract_strided_slice %234 {offsets = [4, 0], sizes = [8, 32], strides = [1, 1]} : vector<16x32xf32> to vector<8x32xf32>
    %240 = vector.extract_strided_slice %234 {offsets = [5, 0], sizes = [8, 32], strides = [1, 1]} : vector<16x32xf32> to vector<8x32xf32>
    %241 = vector.extract_strided_slice %234 {offsets = [6, 0], sizes = [8, 32], strides = [1, 1]} : vector<16x32xf32> to vector<8x32xf32>
    %242 = vector.extract_strided_slice %234 {offsets = [7, 0], sizes = [8, 32], strides = [1, 1]} : vector<16x32xf32> to vector<8x32xf32>
    %243 = vector.extract_strided_slice %234 {offsets = [8, 0], sizes = [8, 32], strides = [1, 1]} : vector<16x32xf32> to vector<8x32xf32>
    %244 = tpu.concatenate %235, %236, %237, %238, %239, %240, %241, %242, %243 in 1 : vector<8x32xf32>, vector<8x32xf32>, vector<8x32xf32>, vector<8x32xf32>, vector<8x32xf32>, vector<8x32xf32>, vector<8x32xf32>, vector<8x32xf32>, vector<8x32xf32> -> vector<8x288xf32>
    %245 = arith.truncf %244 : vector<8x288xf32> to vector<8x288xbf16>
    %c0_86 = arith.constant 0 : index
    %c0_87 = arith.constant 0 : index
    %246 = vector.load %arg13[%c0_86, %c0_87] : memref<288x64xbf16, #tpu.memory_space<vmem>>, vector<288x64xbf16>
    %cst_88 = arith.constant dense<0.000000e+00> : vector<8x64xf32>
    %247 = tpu.matmul %245, %246, %cst_88 {dimension_numbers = #tpu.dot_dimension_numbers<[1], [0], [0], [1], [0, 0, 1, 1], [], []>} : vector<8x288xbf16>, vector<288x64xbf16>, vector<8x64xf32> -> vector<8x64xf32>
    %c0_89 = arith.constant 0 : index
    %c0_90 = arith.constant 0 : index
    %248 = vector.load %arg14[%c0_89, %c0_90] : memref<1x64xf32, #tpu.memory_space<vmem>>, vector<1x64xf32>
    %249 = vector.broadcast %248 : vector<1x64xf32> to vector<8x64xf32>
    %250 = arith.addf %247, %249 : vector<8x64xf32>
    %cst_91 = arith.constant 0.000000e+00 : f32
    %251 = vector.broadcast %cst_91 : f32 to vector<8x64xf32>
    %252 = arith.maximumf %250, %251 : vector<8x64xf32>
    %253 = arith.truncf %252 : vector<8x64xf32> to vector<8x64xbf16>
    %c0_92 = arith.constant 0 : index
    %c0_93 = arith.constant 0 : index
    %254 = vector.load %arg15[%c0_92, %c0_93] : memref<64x32xbf16, #tpu.memory_space<vmem>>, vector<64x32xbf16>
    %cst_94 = arith.constant dense<0.000000e+00> : vector<8x32xf32>
    %255 = tpu.matmul %253, %254, %cst_94 {dimension_numbers = #tpu.dot_dimension_numbers<[1], [0], [0], [1], [0, 0, 1, 1], [], []>} : vector<8x64xbf16>, vector<64x32xbf16>, vector<8x32xf32> -> vector<8x32xf32>
    %c0_95 = arith.constant 0 : index
    %c0_96 = arith.constant 0 : index
    %256 = vector.load %arg16[%c0_95, %c0_96] : memref<1x32xf32, #tpu.memory_space<vmem>>, vector<1x32xf32>
    %257 = vector.broadcast %256 : vector<1x32xf32> to vector<8x32xf32>
    %258 = arith.addf %255, %257 : vector<8x32xf32>
    %259 = arith.addf %232, %258 : vector<8x32xf32>
    %c0_97 = arith.constant 0 : index
    %c0_98 = arith.constant 0 : index
    %260 = vector.load %arg21[%c0_97, %c0_98] : memref<1x32xf32, #tpu.memory_space<vmem>>, vector<1x32xf32>
    %c0_99 = arith.constant 0 : index
    %c0_100 = arith.constant 0 : index
    %261 = vector.load %arg22[%c0_99, %c0_100] : memref<1x32xf32, #tpu.memory_space<vmem>>, vector<1x32xf32>
    %cst_101 = arith.constant dense<0.000000e+00> : vector<8xf32>
    %262 = vector.multi_reduction <add>, %259, %cst_101 [1] : vector<8x32xf32> to vector<8xf32>
    %263 = vector.shape_cast %262 : vector<8xf32> to vector<8x1xf32>
    %cst_102 = arith.constant 3.200000e+01 : f32
    %264 = vector.broadcast %cst_102 : f32 to vector<8x1xf32>
    %265 = arith.divf %263, %264 : vector<8x1xf32>
    %266 = vector.broadcast %265 : vector<8x1xf32> to vector<8x32xf32>
    %267 = arith.subf %259, %266 : vector<8x32xf32>
    %268 = arith.mulf %267, %267 : vector<8x32xf32>
    %cst_103 = arith.constant dense<0.000000e+00> : vector<8xf32>
    %269 = vector.multi_reduction <add>, %268, %cst_103 [1] : vector<8x32xf32> to vector<8xf32>
    %270 = vector.shape_cast %269 : vector<8xf32> to vector<8x1xf32>
    %cst_104 = arith.constant 3.200000e+01 : f32
    %271 = vector.broadcast %cst_104 : f32 to vector<8x1xf32>
    %272 = arith.divf %270, %271 : vector<8x1xf32>
    %273 = vector.broadcast %265 : vector<8x1xf32> to vector<8x32xf32>
    %274 = arith.subf %259, %273 : vector<8x32xf32>
    %cst_105 = arith.constant 9.99999974E-6 : f32
    %275 = vector.broadcast %cst_105 : f32 to vector<8x1xf32>
    %276 = arith.addf %272, %275 : vector<8x1xf32>
    %277 = math.rsqrt %276 : vector<8x1xf32>
    %278 = vector.broadcast %277 : vector<8x1xf32> to vector<8x32xf32>
    %279 = arith.mulf %274, %278 : vector<8x32xf32>
    %280 = vector.broadcast %260 : vector<1x32xf32> to vector<8x32xf32>
    %281 = arith.mulf %279, %280 : vector<8x32xf32>
    %282 = vector.broadcast %261 : vector<1x32xf32> to vector<8x32xf32>
    %283 = arith.addf %281, %282 : vector<8x32xf32>
    %c0_106 = arith.constant 0 : index
    %c0_107 = arith.constant 0 : index
    %c0_108 = arith.constant 0 : index
    %284 = vector.load %arg23[%c0_106, %c0_107, %c0_108] : memref<1x8x32xf32, #tpu.memory_space<vmem>>, vector<1x8x32xf32>
    %285 = vector.shape_cast %284 : vector<1x8x32xf32> to vector<8x32xf32>
    %286 = vector.shape_cast %283 : vector<8x32xf32> to vector<1x8x32xf32>
    tpu.vector_store %arg23[%c0_106, %c0_107, %c0_108], %286 {strides = array<i32>} : memref<1x8x32xf32, #tpu.memory_space<vmem>>, vector<1x8x32xf32>,
    return
  }
  func.func @transform_0(%arg0: i32) -> (i32, i32, i32) {
    %c0_i32 = arith.constant 0 : i32
    %c0_i32_0 = arith.constant 0 : i32
    %c0_i32_1 = arith.constant 0 : i32
    return %arg0, %c0_i32, %c0_i32_0 : i32, i32, i32
  }
  func.func @transform_1(%arg0: i32) -> (i32, i32, i32) {
    %c0_i32 = arith.constant 0 : i32
    %c0_i32_0 = arith.constant 0 : i32
    %c0_i32_1 = arith.constant 0 : i32
    return %arg0, %c0_i32, %c0_i32_0 : i32, i32, i32
  }
  func.func @transform_2(%arg0: i32) -> (i32, i32) {
    %c0_i32 = arith.constant 0 : i32
    %c0_i32_0 = arith.constant 0 : i32
    %c0_i32_1 = arith.constant 0 : i32
    return %c0_i32, %c0_i32_0 : i32, i32
  }
  func.func @transform_3(%arg0: i32) -> (i32, i32) {
    %c0_i32 = arith.constant 0 : i32
    %c0_i32_0 = arith.constant 0 : i32
    %c0_i32_1 = arith.constant 0 : i32
    return %c0_i32, %c0_i32_0 : i32, i32
  }
  func.func @transform_4(%arg0: i32) -> (i32, i32) {
    %c0_i32 = arith.constant 0 : i32
    %c0_i32_0 = arith.constant 0 : i32
    %c0_i32_1 = arith.constant 0 : i32
    return %c0_i32, %c0_i32_0 : i32, i32
  }
  func.func @transform_5(%arg0: i32) -> (i32, i32) {
    %c0_i32 = arith.constant 0 : i32
    %c0_i32_0 = arith.constant 0 : i32
    %c0_i32_1 = arith.constant 0 : i32
    return %c0_i32, %c0_i32_0 : i32, i32
  }
  func.func @transform_6(%arg0: i32) -> (i32, i32) {
    %c0_i32 = arith.constant 0 : i32
    %c0_i32_0 = arith.constant 0 : i32
    %c0_i32_1 = arith.constant 0 : i32
    return %c0_i32, %c0_i32_0 : i32, i32
  }
  func.func @transform_7(%arg0: i32) -> (i32, i32) {
    %c0_i32 = arith.constant 0 : i32
    %c0_i32_0 = arith.constant 0 : i32
    %c0_i32_1 = arith.constant 0 : i32
    return %c0_i32, %c0_i32_0 : i32, i32
  }
  func.func @transform_8(%arg0: i32) -> (i32, i32) {
    %c0_i32 = arith.constant 0 : i32
    %c0_i32_0 = arith.constant 0 : i32
    %c0_i32_1 = arith.constant 0 : i32
    return %c0_i32, %c0_i32_0 : i32, i32
  }
  func.func @transform_9(%arg0: i32) -> (i32, i32) {
    %c0_i32 = arith.constant 0 : i32
    %c0_i32_0 = arith.constant 0 : i32
    %c0_i32_1 = arith.constant 0 : i32
    return %c0_i32, %c0_i32_0 : i32, i32
  }
  func.func @transform_10(%arg0: i32) -> (i32, i32) {
    %c0_i32 = arith.constant 0 : i32
    %c0_i32_0 = arith.constant 0 : i32
    %c0_i32_1 = arith.constant 0 : i32
    return %c0_i32, %c0_i32_0 : i32, i32
  }
  func.func @transform_11(%arg0: i32) -> (i32, i32) {
    %c0_i32 = arith.constant 0 : i32
    %c0_i32_0 = arith.constant 0 : i32
    %c0_i32_1 = arith.constant 0 : i32
    return %c0_i32, %c0_i32_0 : i32, i32
  }
  func.func @transform_12(%arg0: i32) -> (i32, i32) {
    %c0_i32 = arith.constant 0 : i32
    %c0_i32_0 = arith.constant 0 : i32
    %c0_i32_1 = arith.constant 0 : i32
    return %c0_i32, %c0_i32_0 : i32, i32
  }
  func.func @transform_13(%arg0: i32) -> (i32, i32) {
    %c0_i32 = arith.constant 0 : i32
    %c0_i32_0 = arith.constant 0 : i32
    %c0_i32_1 = arith.constant 0 : i32
    return %c0_i32, %c0_i32_0 : i32, i32
  }
  func.func @transform_14(%arg0: i32) -> (i32, i32) {
    %c0_i32 = arith.constant 0 : i32
    %c0_i32_0 = arith.constant 0 : i32
    %c0_i32_1 = arith.constant 0 : i32
    return %c0_i32, %c0_i32_0 : i32, i32
  }
  func.func @transform_15(%arg0: i32) -> (i32, i32) {
    %c0_i32 = arith.constant 0 : i32
    %c0_i32_0 = arith.constant 0 : i32
    %c0_i32_1 = arith.constant 0 : i32
    return %c0_i32, %c0_i32_0 : i32, i32
  }
  func.func @transform_16(%arg0: i32) -> (i32, i32) {
    %c0_i32 = arith.constant 0 : i32
    %c0_i32_0 = arith.constant 0 : i32
    %c0_i32_1 = arith.constant 0 : i32
    return %c0_i32, %c0_i32_0 : i32, i32
  }
  func.func @transform_17(%arg0: i32) -> (i32, i32) {
    %c0_i32 = arith.constant 0 : i32
    %c0_i32_0 = arith.constant 0 : i32
    %c0_i32_1 = arith.constant 0 : i32
    return %c0_i32, %c0_i32_0 : i32, i32
  }
  func.func @transform_18(%arg0: i32) -> (i32, i32) {
    %c0_i32 = arith.constant 0 : i32
    %c0_i32_0 = arith.constant 0 : i32
    %c0_i32_1 = arith.constant 0 : i32
    return %c0_i32, %c0_i32_0 : i32, i32
  }
  func.func @transform_19(%arg0: i32) -> (i32, i32) {
    %c0_i32 = arith.constant 0 : i32
    %c0_i32_0 = arith.constant 0 : i32
    %c0_i32_1 = arith.constant 0 : i32
    return %c0_i32, %c0_i32_0 : i32, i32
  }
  func.func @transform_20(%arg0: i32) -> (i32, i32) {
    %c0_i32 = arith.constant 0 : i32
    %c0_i32_0 = arith.constant 0 : i32
    %c0_i32_1 = arith.constant 0 : i32
    return %c0_i32, %c0_i32_0 : i32, i32
  }
  func.func @transform_21(%arg0: i32) -> (i32, i32) {
    %c0_i32 = arith.constant 0 : i32
    %c0_i32_0 = arith.constant 0 : i32
    %c0_i32_1 = arith.constant 0 : i32
    return %c0_i32, %c0_i32_0 : i32, i32
  }
  func.func @transform_22(%arg0: i32) -> (i32, i32, i32) {
    %c0_i32 = arith.constant 0 : i32
    %c0_i32_0 = arith.constant 0 : i32
    %c0_i32_1 = arith.constant 0 : i32
    return %arg0, %c0_i32, %c0_i32_0 : i32, i32, i32
  }
  func.func @transform_23(%arg0: i32) -> (i32, i32, i32) {
    %c0_i32 = arith.constant 0 : i32
    %c0_i32_0 = arith.constant 0 : i32
    %c0_i32_1 = arith.constant 0 : i32
    return %arg0, %c0_i32, %c0_i32_0 : i32, i32, i32
  }
}

</mosaic_0001>

<llo_original>
// kernel: tpu_custom_call.1
$region0: #{tpu_custom_call.1}
  #allocation0 [shape = 'u32[]', space=smem, size = 0x4, offset = 0x4, fixed_abs, tag = 'smem constant byte address 0x4 - core index']
  #allocation1 [shape = 'u32[72,128]{1,0:T(1,128)}', space=vmem, size = 0x9000, scoped, tag = 'internal scratch']
  %s0 = inlined_call_operand.vmem [shape: f32[2,8,32], index: 0, kind: input, shape index: {}]
  %s1 = inlined_call_operand.vmem [shape: f32[2,16,32], index: 1, kind: input, shape index: {}]
  %s2 = inlined_call_operand.vmem [shape: bf16[32,96], index: 2, kind: input, shape index: {}]
  %s3 = inlined_call_operand.vmem [shape: f32[1,96], index: 3, kind: input, shape index: {}]
  %s4 = inlined_call_operand.vmem [shape: bf16[32,32], index: 4, kind: input, shape index: {}]
  %s5 = inlined_call_operand.vmem [shape: f32[1,32], index: 5, kind: input, shape index: {}]
  %s6 = inlined_call_operand.vmem [shape: bf16[32,32], index: 6, kind: input, shape index: {}]
  %s7 = inlined_call_operand.vmem [shape: f32[1,32], index: 7, kind: input, shape index: {}]
  %s8 = inlined_call_operand.vmem [shape: bf16[32,64], index: 8, kind: input, shape index: {}]
  %s9 = inlined_call_operand.vmem [shape: f32[1,64], index: 9, kind: input, shape index: {}]
  %s10 = inlined_call_operand.vmem [shape: bf16[32,32], index: 10, kind: input, shape index: {}]
  %s11 = inlined_call_operand.vmem [shape: f32[1,32], index: 11, kind: input, shape index: {}]
  %s12 = inlined_call_operand.vmem [shape: bf16[288,64], index: 12, kind: input, shape index: {}]
  %s13 = inlined_call_operand.vmem [shape: f32[1,64], index: 13, kind: input, shape index: {}]
  %s14 = inlined_call_operand.vmem [shape: bf16[64,32], index: 14, kind: input, shape index: {}]
  %s15 = inlined_call_operand.vmem [shape: f32[1,32], index: 15, kind: input, shape index: {}]
  %s16 = inlined_call_operand.vmem [shape: f32[1,32], index: 16, kind: input, shape index: {}]
  %s17 = inlined_call_operand.vmem [shape: f32[1,32], index: 17, kind: input, shape index: {}]
  %s18 = inlined_call_operand.vmem [shape: f32[1,32], index: 18, kind: input, shape index: {}]
  %s19 = inlined_call_operand.vmem [shape: f32[1,32], index: 19, kind: input, shape index: {}]
  %s20 = inlined_call_operand.vmem [shape: f32[1,32], index: 20, kind: input, shape index: {}]
  %s21 = inlined_call_operand.vmem [shape: f32[1,32], index: 21, kind: input, shape index: {}]
  %s22 = inlined_call_operand.hbm [shape: f32[2,8,32], index: 22, kind: output, shape index: {0}]
  %s23 = inlined_call_operand.hbm [shape: f32[2,8,16], index: 23, kind: output, shape index: {1}]
  %24 = xla_tuple %s22, %s23
  %s25 = sld [smem:[#allocation0]]
  $region129: #{tpu_custom_call.1} parent=0
    _
  %s27 = ssub.s32 1, %s25
  %s28 = scalar_select 0, %s27, %s25
  $region1: #{tpu_custom_call.1} parent=0
    #allocation2 [shape = 'u8[8192]{0}', space=vmem, size = 0x2000, scoped, tag = 'output window, operand 0']
    #allocation3 [shape = 's32[2]{0}', space=sflag, size = 0x8, scoped, tag = 'scoped memory for tpu_custom_call.1']
    #allocation4 [shape = 'u8[8192]{0}', space=vmem, size = 0x2000, scoped, tag = 'output window, operand 1']
    #allocation5 [shape = 's32[2]{0}', space=sflag, size = 0x8, scoped, tag = 'scoped memory for tpu_custom_call.1']
    %29 = vsyncpa [#allocation3], 0
    %s30 = scalar_lea.sflag [#allocation3], 1
    %31 = vsyncpa %s30, 0
    %32 = vsyncpa [#allocation5], 0
    %s33 = scalar_lea.sflag [#allocation5], 1
    %34 = vsyncpa %s33, 0
    loop: start=0, step=1, limit=4
    $region2: #{tpu_custom_call.1} parent=1 // loop_pre_header
      _
    $region3: #{tpu_custom_call.1} parent=1 // loop_header
      %s36 = sphi 0, %s40
      %p37 = scmp.ge.s32.totalorder %s36, 4
      %s46 = sphi 0, %s48
      %s49 = sphi 0, %s46
      %s50 = sphi 0, %s49
      %s66 = sphi 0, %s50
      %s72 = sphi 0, %s74
      %s75 = sphi 0, %s72
      %s76 = sphi 0, %s75
      %s92 = sphi 0, %s76
      %s96 = sphi 0, %s96
      %s98 = sphi 0, %s96
      %s99 = sphi 0, %s98
      %s113 = sphi 0, %s99
      %s117 = sphi 0, %s117
      %s119 = sphi 0, %s117
      %s120 = sphi 0, %s119
      %s134 = sphi 0, %s120
      %s138 = sphi 0, %s138
      %s140 = sphi 0, %s138
      %s141 = sphi 0, %s140
      %s155 = sphi 0, %s141
      %s159 = sphi 0, %s159
      %s161 = sphi 0, %s159
      %s162 = sphi 0, %s161
      %s176 = sphi 0, %s162
      %s180 = sphi 0, %s180
      %s182 = sphi 0, %s180
      %s183 = sphi 0, %s182
      %s197 = sphi 0, %s183
      %s201 = sphi 0, %s201
      %s203 = sphi 0, %s201
      %s204 = sphi 0, %s203
      %s218 = sphi 0, %s204
      %s222 = sphi 0, %s222
      %s224 = sphi 0, %s222
      %s225 = sphi 0, %s224
      %s239 = sphi 0, %s225
      %s243 = sphi 0, %s243
      %s245 = sphi 0, %s243
      %s246 = sphi 0, %s245
      %s260 = sphi 0, %s246
      %s264 = sphi 0, %s264
      %s266 = sphi 0, %s264
      %s267 = sphi 0, %s266
      %s281 = sphi 0, %s267
      %s285 = sphi 0, %s285
      %s287 = sphi 0, %s285
      %s288 = sphi 0, %s287
      %s302 = sphi 0, %s288
      %s306 = sphi 0, %s306
      %s308 = sphi 0, %s306
      %s309 = sphi 0, %s308
      %s323 = sphi 0, %s309
      %s327 = sphi 0, %s327
      %s329 = sphi 0, %s327
      %s330 = sphi 0, %s329
      %s344 = sphi 0, %s330
      %s348 = sphi 0, %s348
      %s350 = sphi 0, %s348
      %s351 = sphi 0, %s350
      %s365 = sphi 0, %s351
      %s369 = sphi 0, %s369
      %s371 = sphi 0, %s369
      %s372 = sphi 0, %s371
      %s386 = sphi 0, %s372
      %s390 = sphi 0, %s390
      %s392 = sphi 0, %s390
      %s393 = sphi 0, %s392
      %s407 = sphi 0, %s393
      %s411 = sphi 0, %s411
      %s413 = sphi 0, %s411
      %s414 = sphi 0, %s413
      %s428 = sphi 0, %s414
      %s432 = sphi 0, %s432
      %s434 = sphi 0, %s432
      %s435 = sphi 0, %s434
      %s449 = sphi 0, %s435
      %s453 = sphi 0, %s453
      %s455 = sphi 0, %s453
      %s456 = sphi 0, %s455
      %s470 = sphi 0, %s456
      %s474 = sphi 0, %s474
      %s476 = sphi 0, %s474
      %s477 = sphi 0, %s476
      %s491 = sphi 0, %s477
      %s495 = sphi 0, %s495
      %s497 = sphi 0, %s495
      %s498 = sphi 0, %s497
      %s512 = sphi 0, %s498
      %s518 = sphi 0, %s520
      %s521 = sphi 0, %s518
      %s522 = sphi 0, %s521
      %s538 = sphi 0, %s522
      %s544 = sphi 0, %s546
      %s547 = sphi 0, %s544
      %s548 = sphi 0, %s547
      %s564 = sphi 0, %s548
    $region4: #{tpu_custom_call.1} parent=1 // loop_header_branch
      %39 = sbr.rel (%p37) target = $region8
    $region5: #{tpu_custom_call.1} parent=1 // loop_body
      %s41 = ssub.s32 %s36, 1
      %s42 = ssub.s32 %s36, 2
      %s43 = sadd.s32 %s36, 1
      %s44 = ssub.s32 %s36, %s43
      %p45 = scmp.eq.s32.totalorder %s44, 0
      %s47 = sadd.s32 %s46, 1
      %s48 = scalar_select %p45, %s46, %s47
      %p51 = pneg %p45
      %p52 = scmp.eq.s32.totalorder %s36, 1
      %p53 = por %p51, %p52
      %p54 = scmp.ne.s32.totalorder %s46, %s49
      %p55 = scmp.eq.s32.totalorder %s36, 0
      %p56 = por %p54, %p55
      %p57 = scmp.ne.s32.totalorder %s46, %s49
      %p58 = scmp.eq.s32.totalorder %s41, 1
      %p59 = por %p57, %p58
      %p60 = scmp.ne.s32.totalorder %s49, %s50
      %p61 = scmp.eq.s32.totalorder %s41, 0
      %p62 = por %p60, %p61
      %p63 = scmp.ne.s32.totalorder %s49, %s50
      %p64 = scmp.eq.s32.totalorder %s42, 1
      %p65 = por %p63, %p64
      %p67 = scmp.ne.s32.totalorder %s50, %s66
      %p68 = scmp.eq.s32.totalorder %s42, 0
      %p69 = por %p67, %p68
      %s70 = ssub.s32 %s36, %s43
      %p71 = scmp.eq.s32.totalorder %s70, 0
      %s73 = sadd.s32 %s72, 1
      %s74 = scalar_select %p71, %s72, %s73
      %p77 = pneg %p71
      %p78 = scmp.eq.s32.totalorder %s36, 1
      %p79 = por %p77, %p78
      %p80 = scmp.ne.s32.totalorder %s72, %s75
      %p81 = scmp.eq.s32.totalorder %s36, 0
      %p82 = por %p80, %p81
      %p83 = scmp.ne.s32.totalorder %s72, %s75
      %p84 = scmp.eq.s32.totalorder %s41, 1
      %p85 = por %p83, %p84
      %p86 = scmp.ne.s32.totalorder %s75, %s76
      %p87 = scmp.eq.s32.totalorder %s41, 0
      %p88 = por %p86, %p87
      %p89 = scmp.ne.s32.totalorder %s75, %s76
      %p90 = scmp.eq.s32.totalorder %s42, 1
      %p91 = por %p89, %p90
      %p93 = scmp.ne.s32.totalorder %s76, %s92
      %p94 = scmp.eq.s32.totalorder %s42, 0
      %p95 = por %p93, %p94
      %s97 = sadd.s32 %s96, 1
      %p100 = scmp.eq.s32.totalorder %s36, 1
      %p101 = scmp.ne.s32.totalorder %s96, %s98
      %p102 = scmp.eq.s32.totalorder %s36, 0
      %p103 = por %p101, %p102
      %p104 = scmp.ne.s32.totalorder %s96, %s98
      %p105 = scmp.eq.s32.totalorder %s41, 1
      %p106 = por %p104, %p105
      %p107 = scmp.ne.s32.totalorder %s98, %s99
      %p108 = scmp.eq.s32.totalorder %s41, 0
      %p109 = por %p107, %p108
      %p110 = scmp.ne.s32.totalorder %s98, %s99
      %p111 = scmp.eq.s32.totalorder %s42, 1
      %p112 = por %p110, %p111
      %p114 = scmp.ne.s32.totalorder %s99, %s113
      %p115 = scmp.eq.s32.totalorder %s42, 0
      %p116 = por %p114, %p115
      %s118 = sadd.s32 %s117, 1
      %p121 = scmp.eq.s32.totalorder %s36, 1
      %p122 = scmp.ne.s32.totalorder %s117, %s119
      %p123 = scmp.eq.s32.totalorder %s36, 0
      %p124 = por %p122, %p123
      %p125 = scmp.ne.s32.totalorder %s117, %s119
      %p126 = scmp.eq.s32.totalorder %s41, 1
      %p127 = por %p125, %p126
      %p128 = scmp.ne.s32.totalorder %s119, %s120
      %p129 = scmp.eq.s32.totalorder %s41, 0
      %p130 = por %p128, %p129
      %p131 = scmp.ne.s32.totalorder %s119, %s120
      %p132 = scmp.eq.s32.totalorder %s42, 1
      %p133 = por %p131, %p132
      %p135 = scmp.ne.s32.totalorder %s120, %s134
      %p136 = scmp.eq.s32.totalorder %s42, 0
      %p137 = por %p135, %p136
      %s139 = sadd.s32 %s138, 1
      %p142 = scmp.eq.s32.totalorder %s36, 1
      %p143 = scmp.ne.s32.totalorder %s138, %s140
      %p144 = scmp.eq.s32.totalorder %s36, 0
      %p145 = por %p143, %p144
      %p146 = scmp.ne.s32.totalorder %s138, %s140
      %p147 = scmp.eq.s32.totalorder %s41, 1
      %p148 = por %p146, %p147
      %p149 = scmp.ne.s32.totalorder %s140, %s141
      %p150 = scmp.eq.s32.totalorder %s41, 0
      %p151 = por %p149, %p150
      %p152 = scmp.ne.s32.totalorder %s140, %s141
      %p153 = scmp.eq.s32.totalorder %s42, 1
      %p154 = por %p152, %p153
      %p156 = scmp.ne.s32.totalorder %s141, %s155
      %p157 = scmp.eq.s32.totalorder %s42, 0
      %p158 = por %p156, %p157
      %s160 = sadd.s32 %s159, 1
      %p163 = scmp.eq.s32.totalorder %s36, 1
      %p164 = scmp.ne.s32.totalorder %s159, %s161
      %p165 = scmp.eq.s32.totalorder %s36, 0
      %p166 = por %p164, %p165
      %p167 = scmp.ne.s32.totalorder %s159, %s161
      %p168 = scmp.eq.s32.totalorder %s41, 1
      %p169 = por %p167, %p168
      %p170 = scmp.ne.s32.totalorder %s161, %s162
      %p171 = scmp.eq.s32.totalorder %s41, 0
      %p172 = por %p170, %p171
      %p173 = scmp.ne.s32.totalorder %s161, %s162
      %p174 = scmp.eq.s32.totalorder %s42, 1
      %p175 = por %p173, %p174
      %p177 = scmp.ne.s32.totalorder %s162, %s176
      %p178 = scmp.eq.s32.totalorder %s42, 0
      %p179 = por %p177, %p178
      %s181 = sadd.s32 %s180, 1
      %p184 = scmp.eq.s32.totalorder %s36, 1
      %p185 = scmp.ne.s32.totalorder %s180, %s182
      %p186 = scmp.eq.s32.totalorder %s36, 0
      %p187 = por %p185, %p186
      %p188 = scmp.ne.s32.totalorder %s180, %s182
      %p189 = scmp.eq.s32.totalorder %s41, 1
      %p190 = por %p188, %p189
      %p191 = scmp.ne.s32.totalorder %s182, %s183
      %p192 = scmp.eq.s32.totalorder %s41, 0
      %p193 = por %p191, %p192
      %p194 = scmp.ne.s32.totalorder %s182, %s183
      %p195 = scmp.eq.s32.totalorder %s42, 1
      %p196 = por %p194, %p195
      %p198 = scmp.ne.s32.totalorder %s183, %s197
      %p199 = scmp.eq.s32.totalorder %s42, 0
      %p200 = por %p198, %p199
      %s202 = sadd.s32 %s201, 1
      %p205 = scmp.eq.s32.totalorder %s36, 1
      %p206 = scmp.ne.s32.totalorder %s201, %s203
      %p207 = scmp.eq.s32.totalorder %s36, 0
      %p208 = por %p206, %p207
      %p209 = scmp.ne.s32.totalorder %s201, %s203
      %p210 = scmp.eq.s32.totalorder %s41, 1
      %p211 = por %p209, %p210
      %p212 = scmp.ne.s32.totalorder %s203, %s204
      %p213 = scmp.eq.s32.totalorder %s41, 0
      %p214 = por %p212, %p213
      %p215 = scmp.ne.s32.totalorder %s203, %s204
      %p216 = scmp.eq.s32.totalorder %s42, 1
      %p217 = por %p215, %p216
      %p219 = scmp.ne.s32.totalorder %s204, %s218
      %p220 = scmp.eq.s32.totalorder %s42, 0
      %p221 = por %p219, %p220
      %s223 = sadd.s32 %s222, 1
      %p226 = scmp.eq.s32.totalorder %s36, 1
      %p227 = scmp.ne.s32.totalorder %s222, %s224
      %p228 = scmp.eq.s32.totalorder %s36, 0
      %p229 = por %p227, %p228
      %p230 = scmp.ne.s32.totalorder %s222, %s224
      %p231 = scmp.eq.s32.totalorder %s41, 1
      %p232 = por %p230, %p231
      %p233 = scmp.ne.s32.totalorder %s224, %s225
      %p234 = scmp.eq.s32.totalorder %s41, 0
      %p235 = por %p233, %p234
      %p236 = scmp.ne.s32.totalorder %s224, %s225
      %p237 = scmp.eq.s32.totalorder %s42, 1
      %p238 = por %p236, %p237
      %p240 = scmp.ne.s32.totalorder %s225, %s239
      %p241 = scmp.eq.s32.totalorder %s42, 0
      %p242 = por %p240, %p241
      %s244 = sadd.s32 %s243, 1
      %p247 = scmp.eq.s32.totalorder %s36, 1
      %p248 = scmp.ne.s32.totalorder %s243, %s245
      %p249 = scmp.eq.s32.totalorder %s36, 0
      %p250 = por %p248, %p249
      %p251 = scmp.ne.s32.totalorder %s243, %s245
      %p252 = scmp.eq.s32.totalorder %s41, 1
      %p253 = por %p251, %p252
      %p254 = scmp.ne.s32.totalorder %s245, %s246
      %p255 = scmp.eq.s32.totalorder %s41, 0
      %p256 = por %p254, %p255
      %p257 = scmp.ne.s32.totalorder %s245, %s246
      %p258 = scmp.eq.s32.totalorder %s42, 1
      %p259 = por %p257, %p258
      %p261 = scmp.ne.s32.totalorder %s246, %s260
      %p262 = scmp.eq.s32.totalorder %s42, 0
      %p263 = por %p261, %p262
      %s265 = sadd.s32 %s264, 1
      %p268 = scmp.eq.s32.totalorder %s36, 1
      %p269 = scmp.ne.s32.totalorder %s264, %s266
      %p270 = scmp.eq.s32.totalorder %s36, 0
      %p271 = por %p269, %p270
      %p272 = scmp.ne.s32.totalorder %s264, %s266
      %p273 = scmp.eq.s32.totalorder %s41, 1
      %p274 = por %p272, %p273
      %p275 = scmp.ne.s32.totalorder %s266, %s267
      %p276 = scmp.eq.s32.totalorder %s41, 0
      %p277 = por %p275, %p276
      %p278 = scmp.ne.s32.totalorder %s266, %s267
      %p279 = scmp.eq.s32.totalorder %s42, 1
      %p280 = por %p278, %p279
      %p282 = scmp.ne.s32.totalorder %s267, %s281
      %p283 = scmp.eq.s32.totalorder %s42, 0
      %p284 = por %p282, %p283
      %s286 = sadd.s32 %s285, 1
      %p289 = scmp.eq.s32.totalorder %s36, 1
      %p290 = scmp.ne.s32.totalorder %s285, %s287
      %p291 = scmp.eq.s32.totalorder %s36, 0
      %p292 = por %p290, %p291
      %p293 = scmp.ne.s32.totalorder %s285, %s287
      %p294 = scmp.eq.s32.totalorder %s41, 1
      %p295 = por %p293, %p294
      %p296 = scmp.ne.s32.totalorder %s287, %s288
      %p297 = scmp.eq.s32.totalorder %s41, 0
      %p298 = por %p296, %p297
      %p299 = scmp.ne.s32.totalorder %s287, %s288
      %p300 = scmp.eq.s32.totalorder %s42, 1
      %p301 = por %p299, %p300
      %p303 = scmp.ne.s32.totalorder %s288, %s302
      %p304 = scmp.eq.s32.totalorder %s42, 0
      %p305 = por %p303, %p304
      %s307 = sadd.s32 %s306, 1
      %p310 = scmp.eq.s32.totalorder %s36, 1
      %p311 = scmp.ne.s32.totalorder %s306, %s308
      %p312 = scmp.eq.s32.totalorder %s36, 0
      %p313 = por %p311, %p312
      %p314 = scmp.ne.s32.totalorder %s306, %s308
      %p315 = scmp.eq.s32.totalorder %s41, 1
      %p316 = por %p314, %p315
      %p317 = scmp.ne.s32.totalorder %s308, %s309
      %p318 = scmp.eq.s32.totalorder %s41, 0
      %p319 = por %p317, %p318
      %p320 = scmp.ne.s32.totalorder %s308, %s309
      %p321 = scmp.eq.s32.totalorder %s42, 1
      %p322 = por %p320, %p321
      %p324 = scmp.ne.s32.totalorder %s309, %s323
      %p325 = scmp.eq.s32.totalorder %s42, 0
      %p326 = por %p324, %p325
      %s328 = sadd.s32 %s327, 1
      %p331 = scmp.eq.s32.totalorder %s36, 1
      %p332 = scmp.ne.s32.totalorder %s327, %s329
      %p333 = scmp.eq.s32.totalorder %s36, 0
      %p334 = por %p332, %p333
      %p335 = scmp.ne.s32.totalorder %s327, %s329
      %p336 = scmp.eq.s32.totalorder %s41, 1
      %p337 = por %p335, %p336
      %p338 = scmp.ne.s32.totalorder %s329, %s330
      %p339 = scmp.eq.s32.totalorder %s41, 0
      %p340 = por %p338, %p339
      %p341 = scmp.ne.s32.totalorder %s329, %s330
      %p342 = scmp.eq.s32.totalorder %s42, 1
      %p343 = por %p341, %p342
      %p345 = scmp.ne.s32.totalorder %s330, %s344
      %p346 = scmp.eq.s32.totalorder %s42, 0
      %p347 = por %p345, %p346
      %s349 = sadd.s32 %s348, 1
      %p352 = scmp.eq.s32.totalorder %s36, 1
      %p353 = scmp.ne.s32.totalorder %s348, %s350
      %p354 = scmp.eq.s32.totalorder %s36, 0
      %p355 = por %p353, %p354
      %p356 = scmp.ne.s32.totalorder %s348, %s350
      %p357 = scmp.eq.s32.totalorder %s41, 1
      %p358 = por %p356, %p357
      %p359 = scmp.ne.s32.totalorder %s350, %s351
      %p360 = scmp.eq.s32.totalorder %s41, 0
      %p361 = por %p359, %p360
      %p362 = scmp.ne.s32.totalorder %s350, %s351
      %p363 = scmp.eq.s32.totalorder %s42, 1
      %p364 = por %p362, %p363
      %p366 = scmp.ne.s32.totalorder %s351, %s365
      %p367 = scmp.eq.s32.totalorder %s42, 0
      %p368 = por %p366, %p367
      %s370 = sadd.s32 %s369, 1
      %p373 = scmp.eq.s32.totalorder %s36, 1
      %p374 = scmp.ne.s32.totalorder %s369, %s371
      %p375 = scmp.eq.s32.totalorder %s36, 0
      %p376 = por %p374, %p375
      %p377 = scmp.ne.s32.totalorder %s369, %s371
      %p378 = scmp.eq.s32.totalorder %s41, 1
      %p379 = por %p377, %p378
      %p380 = scmp.ne.s32.totalorder %s371, %s372
      %p381 = scmp.eq.s32.totalorder %s41, 0
      %p382 = por %p380, %p381
      %p383 = scmp.ne.s32.totalorder %s371, %s372
      %p384 = scmp.eq.s32.totalorder %s42, 1
      %p385 = por %p383, %p384
      %p387 = scmp.ne.s32.totalorder %s372, %s386
      %p388 = scmp.eq.s32.totalorder %s42, 0
      %p389 = por %p387, %p388
      %s391 = sadd.s32 %s390, 1
      %p394 = scmp.eq.s32.totalorder %s36, 1
      %p395 = scmp.ne.s32.totalorder %s390, %s392
      %p396 = scmp.eq.s32.totalorder %s36, 0
      %p397 = por %p395, %p396
      %p398 = scmp.ne.s32.totalorder %s390, %s392
      %p399 = scmp.eq.s32.totalorder %s41, 1
      %p400 = por %p398, %p399
      %p401 = scmp.ne.s32.totalorder %s392, %s393
      %p402 = scmp.eq.s32.totalorder %s41, 0
      %p403 = por %p401, %p402
      %p404 = scmp.ne.s32.totalorder %s392, %s393
      %p405 = scmp.eq.s32.totalorder %s42, 1
      %p406 = por %p404, %p405
      %p408 = scmp.ne.s32.totalorder %s393, %s407
      %p409 = scmp.eq.s32.totalorder %s42, 0
      %p410 = por %p408, %p409
      %s412 = sadd.s32 %s411, 1
      %p415 = scmp.eq.s32.totalorder %s36, 1
      %p416 = scmp.ne.s32.totalorder %s411, %s413
      %p417 = scmp.eq.s32.totalorder %s36, 0
      %p418 = por %p416, %p417
      %p419 = scmp.ne.s32.totalorder %s411, %s413
      %p420 = scmp.eq.s32.totalorder %s41, 1
      %p421 = por %p419, %p420
      %p422 = scmp.ne.s32.totalorder %s413, %s414
      %p423 = scmp.eq.s32.totalorder %s41, 0
      %p424 = por %p422, %p423
      %p425 = scmp.ne.s32.totalorder %s413, %s414
      %p426 = scmp.eq.s32.totalorder %s42, 1
      %p427 = por %p425, %p426
      %p429 = scmp.ne.s32.totalorder %s414, %s428
      %p430 = scmp.eq.s32.totalorder %s42, 0
      %p431 = por %p429, %p430
      %s433 = sadd.s32 %s432, 1
      %p436 = scmp.eq.s32.totalorder %s36, 1
      %p437 = scmp.ne.s32.totalorder %s432, %s434
      %p438 = scmp.eq.s32.totalorder %s36, 0
      %p439 = por %p437, %p438
      %p440 = scmp.ne.s32.totalorder %s432, %s434
      %p441 = scmp.eq.s32.totalorder %s41, 1
      %p442 = por %p440, %p441
      %p443 = scmp.ne.s32.totalorder %s434, %s435
      %p444 = scmp.eq.s32.totalorder %s41, 0
      %p445 = por %p443, %p444
      %p446 = scmp.ne.s32.totalorder %s434, %s435
      %p447 = scmp.eq.s32.totalorder %s42, 1
      %p448 = por %p446, %p447
      %p450 = scmp.ne.s32.totalorder %s435, %s449
      %p451 = scmp.eq.s32.totalorder %s42, 0
      %p452 = por %p450, %p451
      %s454 = sadd.s32 %s453, 1
      %p457 = scmp.eq.s32.totalorder %s36, 1
      %p458 = scmp.ne.s32.totalorder %s453, %s455
      %p459 = scmp.eq.s32.totalorder %s36, 0
      %p460 = por %p458, %p459
      %p461 = scmp.ne.s32.totalorder %s453, %s455
      %p462 = scmp.eq.s32.totalorder %s41, 1
      %p463 = por %p461, %p462
      %p464 = scmp.ne.s32.totalorder %s455, %s456
      %p465 = scmp.eq.s32.totalorder %s41, 0
      %p466 = por %p464, %p465
      %p467 = scmp.ne.s32.totalorder %s455, %s456
      %p468 = scmp.eq.s32.totalorder %s42, 1
      %p469 = por %p467, %p468
      %p471 = scmp.ne.s32.totalorder %s456, %s470
      %p472 = scmp.eq.s32.totalorder %s42, 0
      %p473 = por %p471, %p472
      %s475 = sadd.s32 %s474, 1
      %p478 = scmp.eq.s32.totalorder %s36, 1
      %p479 = scmp.ne.s32.totalorder %s474, %s476
      %p480 = scmp.eq.s32.totalorder %s36, 0
      %p481 = por %p479, %p480
      %p482 = scmp.ne.s32.totalorder %s474, %s476
      %p483 = scmp.eq.s32.totalorder %s41, 1
      %p484 = por %p482, %p483
      %p485 = scmp.ne.s32.totalorder %s476, %s477
      %p486 = scmp.eq.s32.totalorder %s41, 0
      %p487 = por %p485, %p486
      %p488 = scmp.ne.s32.totalorder %s476, %s477
      %p489 = scmp.eq.s32.totalorder %s42, 1
      %p490 = por %p488, %p489
      %p492 = scmp.ne.s32.totalorder %s477, %s491
      %p493 = scmp.eq.s32.totalorder %s42, 0
      %p494 = por %p492, %p493
      %s496 = sadd.s32 %s495, 1
      %p499 = scmp.eq.s32.totalorder %s36, 1
      %p500 = scmp.ne.s32.totalorder %s495, %s497
      %p501 = scmp.eq.s32.totalorder %s36, 0
      %p502 = por %p500, %p501
      %p503 = scmp.ne.s32.totalorder %s495, %s497
      %p504 = scmp.eq.s32.totalorder %s41, 1
      %p505 = por %p503, %p504
      %p506 = scmp.ne.s32.totalorder %s497, %s498
      %p507 = scmp.eq.s32.totalorder %s41, 0
      %p508 = por %p506, %p507
      %p509 = scmp.ne.s32.totalorder %s497, %s498
      %p510 = scmp.eq.s32.totalorder %s42, 1
      %p511 = por %p509, %p510
      %p513 = scmp.ne.s32.totalorder %s498, %s512
      %p514 = scmp.eq.s32.totalorder %s42, 0
      %p515 = por %p513, %p514
      %s516 = ssub.s32 %s36, %s43
      %p517 = scmp.eq.s32.totalorder %s516, 0
      %s519 = sadd.s32 %s518, 1
      %s520 = scalar_select %p517, %s518, %s519
      %p523 = pneg %p517
      %p524 = scmp.eq.s32.totalorder %s36, 1
      %p525 = por %p523, %p524
      %p526 = scmp.ne.s32.totalorder %s518, %s521
      %p527 = scmp.eq.s32.totalorder %s36, 0
      %p528 = por %p526, %p527
      %p529 = scmp.ne.s32.totalorder %s518, %s521
      %p530 = scmp.eq.s32.totalorder %s41, 1
      %p531 = por %p529, %p530
      %p532 = scmp.ne.s32.totalorder %s521, %s522
      %p533 = scmp.eq.s32.totalorder %s41, 0
      %p534 = por %p532, %p533
      %p535 = scmp.ne.s32.totalorder %s521, %s522
      %p536 = scmp.eq.s32.totalorder %s42, 1
      %p537 = por %p535, %p536
      %p539 = scmp.ne.s32.totalorder %s522, %s538
      %p540 = scmp.eq.s32.totalorder %s42, 0
      %p541 = por %p539, %p540
      %s542 = ssub.s32 %s36, %s43
      %p543 = scmp.eq.s32.totalorder %s542, 0
      %s545 = sadd.s32 %s544, 1
      %s546 = scalar_select %p543, %s544, %s545
      %p549 = pneg %p543
      %p550 = scmp.eq.s32.totalorder %s36, 1
      %p551 = por %p549, %p550
      %p552 = scmp.ne.s32.totalorder %s544, %s547
      %p553 = scmp.eq.s32.totalorder %s36, 0
      %p554 = por %p552, %p553
      %p555 = scmp.ne.s32.totalorder %s544, %s547
      %p556 = scmp.eq.s32.totalorder %s41, 1
      %p557 = por %p555, %p556
      %p558 = scmp.ne.s32.totalorder %s547, %s548
      %p559 = scmp.eq.s32.totalorder %s41, 0
      %p560 = por %p558, %p559
      %p561 = scmp.ne.s32.totalorder %s547, %s548
      %p562 = scmp.eq.s32.totalorder %s42, 1
      %p563 = por %p561, %p562
      %p565 = scmp.ne.s32.totalorder %s548, %s564
      %p566 = scmp.eq.s32.totalorder %s42, 0
      %p567 = por %p565, %p566
      %p568 = scmp.le.s32.totalorder 1, %s36
      %p569 = scmp.lt.s32.totalorder %s36, 3
      %p570 = pnand %p568, %p569
      %p571 = pneg %p570
      // Predicated region
      $region9: #{tpu_custom_call.1} parent=5 // pred_check
        _
      $region10: #{tpu_custom_call.1} parent=5 // pred_check_branch
        %573 = sbr.rel (%p570) target = $region12
      $region11: #{tpu_custom_call.1} parent=5 // pred_region
        %s574 = ssub.s32 %s36, 1
        // Predicated region
        $region13: #{tpu_custom_call.1} parent=11 // pred_check
          %p575 = pneg %p109
        $region14: #{tpu_custom_call.1} parent=11 // pred_check_branch
          %577 = sbr.rel (%p575) target = $region16
        $region15: #{tpu_custom_call.1} parent=11 // pred_region
          _
        $region16: #{tpu_custom_call.1} parent=11 // pred_fallthru
          _
        // Predicated region
        $region17: #{tpu_custom_call.1} parent=11 // pred_check
          %p578 = pneg %p130
        $region18: #{tpu_custom_call.1} parent=11 // pred_check_branch
          %580 = sbr.rel (%p578) target = $region20
        $region19: #{tpu_custom_call.1} parent=11 // pred_region
          _
        $region20: #{tpu_custom_call.1} parent=11 // pred_fallthru
          _
        // Predicated region
        $region21: #{tpu_custom_call.1} parent=11 // pred_check
          %p581 = pneg %p151
        $region22: #{tpu_custom_call.1} parent=11 // pred_check_branch
          %583 = sbr.rel (%p581) target = $region24
        $region23: #{tpu_custom_call.1} parent=11 // pred_region
          _
        $region24: #{tpu_custom_call.1} parent=11 // pred_fallthru
          _
        // Predicated region
        $region25: #{tpu_custom_call.1} parent=11 // pred_check
          %p584 = pneg %p172
        $region26: #{tpu_custom_call.1} parent=11 // pred_check_branch
          %586 = sbr.rel (%p584) target = $region28
        $region27: #{tpu_custom_call.1} parent=11 // pred_region
          _
        $region28: #{tpu_custom_call.1} parent=11 // pred_fallthru
          _
        // Predicated region
        $region29: #{tpu_custom_call.1} parent=11 // pred_check
          %p587 = pneg %p193
        $region30: #{tpu_custom_call.1} parent=11 // pred_check_branch
          %589 = sbr.rel (%p587) target = $region32
        $region31: #{tpu_custom_call.1} parent=11 // pred_region
          _
        $region32: #{tpu_custom_call.1} parent=11 // pred_fallthru
          _
        // Predicated region
        $region33: #{tpu_custom_call.1} parent=11 // pred_check
          %p590 = pneg %p214
        $region34: #{tpu_custom_call.1} parent=11 // pred_check_branch
          %592 = sbr.rel (%p590) target = $region36
        $region35: #{tpu_custom_call.1} parent=11 // pred_region
          _
        $region36: #{tpu_custom_call.1} parent=11 // pred_fallthru
          _
        // Predicated region
        $region37: #{tpu_custom_call.1} parent=11 // pred_check
          %p593 = pneg %p235
        $region38: #{tpu_custom_call.1} parent=11 // pred_check_branch
          %595 = sbr.rel (%p593) target = $region40
        $region39: #{tpu_custom_call.1} parent=11 // pred_region
          _
        $region40: #{tpu_custom_call.1} parent=11 // pred_fallthru
          _
        // Predicated region
        $region41: #{tpu_custom_call.1} parent=11 // pred_check
          %p596 = pneg %p256
        $region42: #{tpu_custom_call.1} parent=11 // pred_check_branch
          %598 = sbr.rel (%p596) target = $region44
        $region43: #{tpu_custom_call.1} parent=11 // pred_region
          _
        $region44: #{tpu_custom_call.1} parent=11 // pred_fallthru
          _
        // Predicated region
        $region45: #{tpu_custom_call.1} parent=11 // pred_check
          %p599 = pneg %p277
        $region46: #{tpu_custom_call.1} parent=11 // pred_check_branch
          %601 = sbr.rel (%p599) target = $region48
        $region47: #{tpu_custom_call.1} parent=11 // pred_region
          _
        $region48: #{tpu_custom_call.1} parent=11 // pred_fallthru
          _
        // Predicated region
        $region49: #{tpu_custom_call.1} parent=11 // pred_check
          %p602 = pneg %p298
        $region50: #{tpu_custom_call.1} parent=11 // pred_check_branch
          %604 = sbr.rel (%p602) target = $region52
        $region51: #{tpu_custom_call.1} parent=11 // pred_region
          _
        $region52: #{tpu_custom_call.1} parent=11 // pred_fallthru
          _
        // Predicated region
        $region53: #{tpu_custom_call.1} parent=11 // pred_check
          %p605 = pneg %p319
        $region54: #{tpu_custom_call.1} parent=11 // pred_check_branch
          %607 = sbr.rel (%p605) target = $region56
        $region55: #{tpu_custom_call.1} parent=11 // pred_region
          _
        $region56: #{tpu_custom_call.1} parent=11 // pred_fallthru
          _
        // Predicated region
        $region57: #{tpu_custom_call.1} parent=11 // pred_check
          %p608 = pneg %p340
        $region58: #{tpu_custom_call.1} parent=11 // pred_check_branch
          %610 = sbr.rel (%p608) target = $region60
        $region59: #{tpu_custom_call.1} parent=11 // pred_region
          _
        $region60: #{tpu_custom_call.1} parent=11 // pred_fallthru
          _
        // Predicated region
        $region61: #{tpu_custom_call.1} parent=11 // pred_check
          %p611 = pneg %p361
        $region62: #{tpu_custom_call.1} parent=11 // pred_check_branch
          %613 = sbr.rel (%p611) target = $region64
        $region63: #{tpu_custom_call.1} parent=11 // pred_region
          _
        $region64: #{tpu_custom_call.1} parent=11 // pred_fallthru
          _
        // Predicated region
        $region65: #{tpu_custom_call.1} parent=11 // pred_check
          %p614 = pneg %p382
        $region66: #{tpu_custom_call.1} parent=11 // pred_check_branch
          %616 = sbr.rel (%p614) target = $region68
        $region67: #{tpu_custom_call.1} parent=11 // pred_region
          _
        $region68: #{tpu_custom_call.1} parent=11 // pred_fallthru
          _
        // Predicated region
        $region69: #{tpu_custom_call.1} parent=11 // pred_check
          %p617 = pneg %p403
        $region70: #{tpu_custom_call.1} parent=11 // pred_check_branch
          %619 = sbr.rel (%p617) target = $region72
        $region71: #{tpu_custom_call.1} parent=11 // pred_region
          _
        $region72: #{tpu_custom_call.1} parent=11 // pred_fallthru
          _
        // Predicated region
        $region73: #{tpu_custom_call.1} parent=11 // pred_check
          %p620 = pneg %p424
        $region74: #{tpu_custom_call.1} parent=11 // pred_check_branch
          %622 = sbr.rel (%p620) target = $region76
        $region75: #{tpu_custom_call.1} parent=11 // pred_region
          _
        $region76: #{tpu_custom_call.1} parent=11 // pred_fallthru
          _
        // Predicated region
        $region77: #{tpu_custom_call.1} parent=11 // pred_check
          %p623 = pneg %p445
        $region78: #{tpu_custom_call.1} parent=11 // pred_check_branch
          %625 = sbr.rel (%p623) target = $region80
        $region79: #{tpu_custom_call.1} parent=11 // pred_region
          _
        $region80: #{tpu_custom_call.1} parent=11 // pred_fallthru
          _
        // Predicated region
        $region81: #{tpu_custom_call.1} parent=11 // pred_check
          %p626 = pneg %p466
        $region82: #{tpu_custom_call.1} parent=11 // pred_check_branch
          %628 = sbr.rel (%p626) target = $region84
        $region83: #{tpu_custom_call.1} parent=11 // pred_region
          _
        $region84: #{tpu_custom_call.1} parent=11 // pred_fallthru
          _
        // Predicated region
        $region85: #{tpu_custom_call.1} parent=11 // pred_check
          %p629 = pneg %p487
        $region86: #{tpu_custom_call.1} parent=11 // pred_check_branch
          %631 = sbr.rel (%p629) target = $region88
        $region87: #{tpu_custom_call.1} parent=11 // pred_region
          _
        $region88: #{tpu_custom_call.1} parent=11 // pred_fallthru
          _
        // Predicated region
        $region89: #{tpu_custom_call.1} parent=11 // pred_check
          %p632 = pneg %p508
        $region90: #{tpu_custom_call.1} parent=11 // pred_check_branch
          %634 = sbr.rel (%p632) target = $region92
        $region91: #{tpu_custom_call.1} parent=11 // pred_region
          _
        $region92: #{tpu_custom_call.1} parent=11 // pred_fallthru
          _
      $region12: #{tpu_custom_call.1} parent=5 // pred_fallthru
        _
      %p635 = scmp.lt.s32.totalorder %s36, 2
      // Predicated region
      $region93: #{tpu_custom_call.1} parent=5 // pred_check
        %p636 = pneg %p635
      $region94: #{tpu_custom_call.1} parent=5 // pred_check_branch
        %638 = sbr.rel (%p636) target = $region96
      $region95: #{tpu_custom_call.1} parent=5 // pred_region
        // Predicated region
        $region97: #{tpu_custom_call.1} parent=95 // pred_check
          %p639 = pneg %p56
        $region98: #{tpu_custom_call.1} parent=95 // pred_check_branch
          %641 = sbr.rel (%p639) target = $region100
        $region99: #{tpu_custom_call.1} parent=95 // pred_region
          %p642 = scmp.lt.s32.totalorder %s36, 1
          %s643 = scalar_select %p642, %s36, 1
          %s644 = smul.addr %s643, 8
          %s645 = scalar_lea.vmem %s0, %s644
        $region100: #{tpu_custom_call.1} parent=95 // pred_fallthru
          _
        // Predicated region
        $region101: #{tpu_custom_call.1} parent=95 // pred_check
          %p646 = pneg %p82
        $region102: #{tpu_custom_call.1} parent=95 // pred_check_branch
          %648 = sbr.rel (%p646) target = $region104
        $region103: #{tpu_custom_call.1} parent=95 // pred_region
          %p649 = scmp.lt.s32.totalorder %s36, 1
          %s650 = scalar_select %p649, %s36, 1
          %s651 = smul.addr %s650, 2
          %s652 = smul.addr %s651, 8
          %s653 = scalar_lea.vmem %s1, %s652
        $region104: #{tpu_custom_call.1} parent=95 // pred_fallthru
          _
      $region96: #{tpu_custom_call.1} parent=5 // pred_fallthru
        _
      %p654 = scmp.le.s32.totalorder 1, %s36
      %p655 = scmp.lt.s32.totalorder %s36, 3
      %p656 = pnand %p654, %p655
      %p657 = pneg %p656
      // Predicated region
      $region105: #{tpu_custom_call.1} parent=5 // pred_check
        _
      $region106: #{tpu_custom_call.1} parent=5 // pred_check_branch
        %659 = sbr.rel (%p656) target = $region108
      $region107: #{tpu_custom_call.1} parent=5 // pred_region
        %s660 = ssub.s32 %s36, 1
        %p661 = scmp.lt.s32.totalorder %s41, 1
        %s662 = scalar_select %p661, %s41, 1
        %s663 = smul.addr %s662, 8
        %s664 = scalar_lea.vmem %s0, %s663
        %p665 = pneg %p62
        %p666 = pneg %p59
        %p667 = scmp.lt.s32.totalorder %s41, 1
        %s668 = scalar_select %p667, %s41, 1
        %s669 = smul.addr %s668, 2
        %s670 = smul.addr %s669, 8
        %s671 = scalar_lea.vmem %s1, %s670
        %p672 = pneg %p88
        %p673 = pneg %p85
        %p674 = pneg %p109
        %p675 = pneg %p106
        %p676 = pneg %p130
        %p677 = pneg %p127
        %p678 = pneg %p151
        %p679 = pneg %p148
        %p680 = pneg %p172
        %p681 = pneg %p169
        %p682 = pneg %p193
        %p683 = pneg %p190
        %p684 = pneg %p214
        %p685 = pneg %p211
        %p686 = pneg %p235
        %p687 = pneg %p232
        %p688 = pneg %p256
        %p689 = pneg %p253
        %p690 = pneg %p277
        %p691 = pneg %p274
        %p692 = pneg %p298
        %p693 = pneg %p295
        %p694 = pneg %p319
        %p695 = pneg %p316
        %p696 = pneg %p340
        %p697 = pneg %p337
        %p698 = pneg %p361
        %p699 = pneg %p358
        %p700 = pneg %p382
        %p701 = pneg %p379
        %p702 = pneg %p403
        %p703 = pneg %p400
        %p704 = pneg %p424
        %p705 = pneg %p421
        %p706 = pneg %p445
        %p707 = pneg %p442
        %p708 = pneg %p466
        %p709 = pneg %p463
        %p710 = pneg %p487
        %p711 = pneg %p484
        %p712 = pneg %p508
        %p713 = pneg %p505
        %p714 = pneg %p534
        %p715 = pneg %p531
        %s716 = sand.u32 %s521, 1
        %s717 = scalar_lea.sflag [#allocation3], %s716
        %s718 = sand.u32 %s521, 1
        %s719 = smul.addr %s718, 8
        %s720 = scalar_lea.vmem [#allocation2], %s719
        %p721 = pneg %p560
        %p722 = pneg %p557
        %s723 = sand.u32 %s547, 1
        %s724 = scalar_lea.sflag [#allocation5], %s723
        %s725 = sand.u32 %s547, 1
        %s726 = smul.addr %s725, 8
        %s727 = scalar_lea.vmem [#allocation4], %s726
        %p728 = scmp.lt.s32.totalorder %s41, 1
        %s729 = scalar_select %p728, %s41, 1
        %s730 = smul.addr %s729, 8
        %s731 = scalar_lea.vmem %s0, %s730
        %p732 = scmp.lt.s32.totalorder %s41, 1
        %s733 = scalar_select %p732, %s41, 1
        %s734 = smul.addr %s733, 2
        %s735 = smul.addr %s734, 8
        %s736 = scalar_lea.vmem %s1, %s735
        %v738 = vld [vmem:[%s731] sm:$0xff]
        %v739 = vld [vmem:[%s736] sm:$0xff]
        %v740 = vld [vmem:[%s736 + $0x8] sm:$0xff]
        %v741 = vpack.c.bf16 %v738, %v738
        %v742 = vld [vmem:[%s2] sm:$0xf]
        %v743 = vld [vmem:[%s2 + $0x4] sm:$0xf]
        %v744 = vld [vmem:[%s2 + $0x8] sm:$0xf]
        %v745 = vld [vmem:[%s2 + $0xc] sm:$0xf]
        %v746 = vld [vmem:[%s3] sm:$0x1]
        %v748 = vperm.slane %v746, 0
        %v754 = vunpack.c.l.b16 %v742
        %v755 = vunpack.c.l.b16 %v743
        %v756 = vunpack.c.l.b16 %v744
        %v757 = vunpack.c.l.b16 %v745
        %v758 = vpack.c.b16 %v755, %v754
        %v759 = vpack.c.b16 %v757, %v756
        %vm762 = vcmask 261120
        %v764 = vsel %vm762, %v741, 0
        %766 = vmatpush.bf16.msra.mxu0 0
        %767 = vmatpush.bf16.msra.mxu0 0
        %768 = vmatpush.bf16.msra.mxu0 0
        %769 = vmatpush.bf16.msra.mxu0 0
        %770 = vmatpush.bf16.msra.mxu0 0
        %771 = vmatpush.bf16.msra.mxu0 0
        %772 = vmatpush.bf16.msra.mxu0 %v759
        %773 = vmatpush.bf16.msra.mxu0 %v758
        %774 = vmatmul.bf16.gmra.mxu0 %v764
        %v775 = vpop.f32.mrf.mxu0
        %v776 = vadd.f32 %v748, %v775
        %v777 = vpop.f32.mrf.mxu0
        %778 = vdwg.mxu0
        %v779 = vmul.f32 %v776, 0.35355338
        %v780 = vpack.c.bf16 %v779, %v779
        %v781 = vpack.c.bf16 %v776, %v776
        %v783 = vunpack.c.l.b16 %v781
        %v784 = vpack.c.b16 %v783, %v783
        %785 = vrot.lane.b32.xlu0 %v784, 96
        %v786 = vpop.permute.xlu0 %785
        %vm787 = vcmask 64512
        %v789 = vsel %vm787, %v780, 0
        %v792 = vsel %vm787, %v786, 0
        %794 = vmatpush.bf16.xpose.msra.mxu0 0
        %795 = vmatpush.bf16.xpose.msra.mxu0 0
        %796 = vmatpush.bf16.xpose.msra.mxu0 0
        %797 = vmatpush.bf16.xpose.msra.mxu0 0
        %798 = vmatpush.bf16.xpose.msra.mxu0 0
        %799 = vmatpush.bf16.xpose.msra.mxu0 0
        %800 = vmatpush.bf16.xpose.msra.mxu0 0
        %801 = vmatpush.bf16.xpose.msra.mxu0 %v792
        %802 = vmatmul.bf16.gmra.mxu0 %v789
        %v803 = vpop.f32.mrf.mxu0
        %v804 = vadd.f32 0.0, %v803
        %v805 = vpop.f32.mrf.mxu0
        %806 = vdwg.mxu0
        %v807 = vsel %vm787, %v804, -inf
        %808 = vmax.xlane.f32.xlu0 %v807
        %v809 = vpop.xlane.xlu0 %808
        %v810 = vsub.f32 %v804, %v809
        %v811 = vmul.f32 %v810, 1.442695
        %v812 = vpow.pop %v811
        %v813 = vsel %vm787, %v812, 0.0
        %814 = vadd.xlane.f32.xlu0 %v813
        %v815 = vpop.xlane.xlu0 %814
        %v816 = vrcp.pop %v815
        %v817 = vmul.f32 %v812, %v816
        %v818 = vpack.c.bf16 %v817, %v817
        %819 = vrot.lane.b32.xlu0 %v784, 64
        %v820 = vpop.permute.xlu0 %819
        %v822 = vsel %vm787, %v818, 0
        %vm824 = vcmask 1043456
        %v826 = vsel %vm824, %v820, 0
        %828 = vmatpush.bf16.msra.mxu0 0
        %829 = vmatpush.bf16.msra.mxu0 0
        %830 = vmatpush.bf16.msra.mxu0 0
        %831 = vmatpush.bf16.msra.mxu0 0
        %832 = vmatpush.bf16.msra.mxu0 0
        %833 = vmatpush.bf16.msra.mxu0 0
        %834 = vmatpush.bf16.msra.mxu0 0
        %835 = vmatpush.bf16.msra.mxu0 %v826
        %836 = vmatmul.bf16.gmra.mxu0 %v822
        %v837 = vpop.f32.mrf.mxu0
        %v838 = vadd.f32 0.0, %v837
        %v839 = vpop.f32.mrf.mxu0
        %840 = vdwg.mxu0
        %v842 = vunpack.c.l.b16 %v780
        %v843 = vpack.c.b16 %v842, %v842
        %844 = vrot.lane.b32.xlu0 %v843, 120
        %v845 = vpop.permute.xlu0 %844
        %846 = vrot.lane.b32.xlu0 %v784, 88
        %v847 = vpop.permute.xlu0 %846
        %v849 = vsel %vm787, %v845, 0
        %v852 = vsel %vm787, %v847, 0
        %854 = vmatpush.bf16.xpose.msra.mxu0 0
        %855 = vmatpush.bf16.xpose.msra.mxu0 0
        %856 = vmatpush.bf16.xpose.msra.mxu0 0
        %857 = vmatpush.bf16.xpose.msra.mxu0 0
        %858 = vmatpush.bf16.xpose.msra.mxu0 0
        %859 = vmatpush.bf16.xpose.msra.mxu0 0
        %860 = vmatpush.bf16.xpose.msra.mxu0 0
        %861 = vmatpush.bf16.xpose.msra.mxu0 %v852
        %862 = vmatmul.bf16.gmra.mxu0 %v849
        %v863 = vpop.f32.mrf.mxu0
        %v864 = vadd.f32 0.0, %v863
        %v865 = vpop.f32.mrf.mxu0
        %866 = vdwg.mxu0
        %v867 = vsel %vm787, %v864, -inf
        %868 = vmax.xlane.f32.xlu0 %v867
        %v869 = vpop.xlane.xlu0 %868
        %v870 = vsub.f32 %v864, %v869
        %v871 = vmul.f32 %v870, 1.442695
        %v872 = vpow.pop %v871
        %v873 = vsel %vm787, %v872, 0.0
        %874 = vadd.xlane.f32.xlu0 %v873
        %v875 = vpop.xlane.xlu0 %874
        %v876 = vrcp.pop %v875
        %v877 = vmul.f32 %v872, %v876
        %v878 = vpack.c.bf16 %v877, %v877
        %879 = vrot.lane.b32.xlu0 %v784, 56
        %v880 = vpop.permute.xlu0 %879
        %v882 = vsel %vm787, %v878, 0
        %v885 = vsel %vm824, %v880, 0
        %887 = vmatpush.bf16.msra.mxu0 0
        %888 = vmatpush.bf16.msra.mxu0 0
        %889 = vmatpush.bf16.msra.mxu0 0
        %890 = vmatpush.bf16.msra.mxu0 0
        %891 = vmatpush.bf16.msra.mxu0 0
        %892 = vmatpush.bf16.msra.mxu0 0
        %893 = vmatpush.bf16.msra.mxu0 0
        %894 = vmatpush.bf16.msra.mxu0 %v885
        %895 = vmatmul.bf16.gmra.mxu0 %v882
        %v896 = vpop.f32.mrf.mxu0
        %v897 = vadd.f32 0.0, %v896
        %v898 = vpop.f32.mrf.mxu0
        %899 = vdwg.mxu0
        %900 = vrot.lane.b32.xlu0 %v843, 112
        %v901 = vpop.permute.xlu0 %900
        %902 = vrot.lane.b32.xlu0 %v784, 80
        %v903 = vpop.permute.xlu0 %902
        %v905 = vsel %vm787, %v901, 0
        %v908 = vsel %vm787, %v903, 0
        %910 = vmatpush.bf16.xpose.msra.mxu0 0
        %911 = vmatpush.bf16.xpose.msra.mxu0 0
        %912 = vmatpush.bf16.xpose.msra.mxu0 0
        %913 = vmatpush.bf16.xpose.msra.mxu0 0
        %914 = vmatpush.bf16.xpose.msra.mxu0 0
        %915 = vmatpush.bf16.xpose.msra.mxu0 0
        %916 = vmatpush.bf16.xpose.msra.mxu0 0
        %917 = vmatpush.bf16.xpose.msra.mxu0 %v908
        %918 = vmatmul.bf16.gmra.mxu0 %v905
        %v919 = vpop.f32.mrf.mxu0
        %v920 = vadd.f32 0.0, %v919
        %v921 = vpop.f32.mrf.mxu0
        %922 = vdwg.mxu0
        %v923 = vsel %vm787, %v920, -inf
        %924 = vmax.xlane.f32.xlu0 %v923
        %v925 = vpop.xlane.xlu0 %924
        %v926 = vsub.f32 %v920, %v925
        %v927 = vmul.f32 %v926, 1.442695
        %v928 = vpow.pop %v927
        %v929 = vsel %vm787, %v928, 0.0
        %930 = vadd.xlane.f32.xlu0 %v929
        %v931 = vpop.xlane.xlu0 %930
        %v932 = vrcp.pop %v931
        %v933 = vmul.f32 %v928, %v932
        %v934 = vpack.c.bf16 %v933, %v933
        %935 = vrot.lane.b32.xlu0 %v784, 48
        %v936 = vpop.permute.xlu0 %935
        %v938 = vsel %vm787, %v934, 0
        %v941 = vsel %vm824, %v936, 0
        %943 = vmatpush.bf16.msra.mxu0 0
        %944 = vmatpush.bf16.msra.mxu0 0
        %945 = vmatpush.bf16.msra.mxu0 0
        %946 = vmatpush.bf16.msra.mxu0 0
        %947 = vmatpush.bf16.msra.mxu0 0
        %948 = vmatpush.bf16.msra.mxu0 0
        %949 = vmatpush.bf16.msra.mxu0 0
        %950 = vmatpush.bf16.msra.mxu0 %v941
        %951 = vmatmul.bf16.gmra.mxu0 %v938
        %v952 = vpop.f32.mrf.mxu0
        %v953 = vadd.f32 0.0, %v952
        %v954 = vpop.f32.mrf.mxu0
        %955 = vdwg.mxu0
        %956 = vrot.lane.b32.xlu0 %v843, 104
        %v957 = vpop.permute.xlu0 %956
        %958 = vrot.lane.b32.xlu0 %v784, 72
        %v959 = vpop.permute.xlu0 %958
        %v961 = vsel %vm787, %v957, 0
        %v964 = vsel %vm787, %v959, 0
        %966 = vmatpush.bf16.xpose.msra.mxu0 0
        %967 = vmatpush.bf16.xpose.msra.mxu0 0
        %968 = vmatpush.bf16.xpose.msra.mxu0 0
        %969 = vmatpush.bf16.xpose.msra.mxu0 0
        %970 = vmatpush.bf16.xpose.msra.mxu0 0
        %971 = vmatpush.bf16.xpose.msra.mxu0 0
        %972 = vmatpush.bf16.xpose.msra.mxu0 0
        %973 = vmatpush.bf16.xpose.msra.mxu0 %v964
        %974 = vmatmul.bf16.gmra.mxu0 %v961
        %v975 = vpop.f32.mrf.mxu0
        %v976 = vadd.f32 0.0, %v975
        %v977 = vpop.f32.mrf.mxu0
        %978 = vdwg.mxu0
        %v979 = vsel %vm787, %v976, -inf
        %980 = vmax.xlane.f32.xlu0 %v979
        %v981 = vpop.xlane.xlu0 %980
        %v982 = vsub.f32 %v976, %v981
        %v983 = vmul.f32 %v982, 1.442695
        %v984 = vpow.pop %v983
        %v985 = vsel %vm787, %v984, 0.0
        %986 = vadd.xlane.f32.xlu0 %v985
        %v987 = vpop.xlane.xlu0 %986
        %v988 = vrcp.pop %v987
        %v989 = vmul.f32 %v984, %v988
        %v990 = vpack.c.bf16 %v989, %v989
        %991 = vrot.lane.b32.xlu0 %v784, 40
        %v992 = vpop.permute.xlu0 %991
        %v994 = vsel %vm787, %v990, 0
        %v997 = vsel %vm824, %v992, 0
        %999 = vmatpush.bf16.msra.mxu0 0
        %1000 = vmatpush.bf16.msra.mxu0 0
        %1001 = vmatpush.bf16.msra.mxu0 0
        %1002 = vmatpush.bf16.msra.mxu0 0
        %1003 = vmatpush.bf16.msra.mxu0 0
        %1004 = vmatpush.bf16.msra.mxu0 0
        %1005 = vmatpush.bf16.msra.mxu0 0
        %1006 = vmatpush.bf16.msra.mxu0 %v997
        %1007 = vmatmul.bf16.gmra.mxu0 %v994
        %v1008 = vpop.f32.mrf.mxu0
        %v1009 = vadd.f32 0.0, %v1008
        %v1010 = vpop.f32.mrf.mxu0
        %1011 = vdwg.mxu0
        %1013 = vrot.lane.b32.xlu0 %v897, 8
        %v1014 = vpop.permute.xlu0 %1013
        %1017 = vrot.lane.b32.xlu0 %v953, 16
        %v1018 = vpop.permute.xlu0 %1017
        %1021 = vrot.lane.b32.xlu0 %v1009, 24
        %v1022 = vpop.permute.xlu0 %1021
        %v1024 = vsel %vm787, %v838, %v1014
        %vm1025 = vcmask 130048
        %v1026 = vsel %vm1025, %v1024, %v1018
        %vm1027 = vcmask 195584
        %v1028 = vsel %vm1027, %v1026, %v1022
        %v1029 = vpack.c.bf16 %v1028, %v1028
        %v1030 = vld [vmem:[%s4] sm:$0xf]
        %v1031 = vld [vmem:[%s4 + $0x4] sm:$0xf]
        %v1032 = vld [vmem:[%s4 + $0x8] sm:$0xf]
        %v1033 = vld [vmem:[%s4 + $0xc] sm:$0xf]
        %v1034 = vld [vmem:[%s5] sm:$0x1]
        %v1036 = vperm.slane %v1034, 0
        %v1042 = vunpack.c.l.b16 %v1030
        %v1043 = vunpack.c.l.b16 %v1031
        %v1044 = vunpack.c.l.b16 %v1032
        %v1045 = vunpack.c.l.b16 %v1033
        %v1046 = vpack.c.b16 %v1043, %v1042
        %v1047 = vpack.c.b16 %v1045, %v1044
        %v1051 = vsel %vm762, %v1029, 0
        %1053 = vmatpush.bf16.msra.mxu0 0
        %1054 = vmatpush.bf16.msra.mxu0 0
        %1055 = vmatpush.bf16.msra.mxu0 0
        %1056 = vmatpush.bf16.msra.mxu0 0
        %1057 = vmatpush.bf16.msra.mxu0 0
        %1058 = vmatpush.bf16.msra.mxu0 0
        %1059 = vmatpush.bf16.msra.mxu0 %v1047
        %1060 = vmatpush.bf16.msra.mxu0 %v1046
        %1061 = vmatmul.bf16.gmra.mxu0 %v1051
        %v1062 = vpop.f32.mrf.mxu0
        %v1063 = vadd.f32 %v1036, %v1062
        %v1064 = vpop.f32.mrf.mxu0
        %1065 = vdwg.mxu0
        %v1066 = vadd.f32 %v738, %v1063
        %v1067 = vld [vmem:[%s16] sm:$0x1]
        %v1068 = vld [vmem:[%s17] sm:$0x1]
        %v1069 = vsel %vm762, %v1066, 0.0
        %1070 = vadd.xlane.f32.xlu0 %v1069
        %v1071 = vpop.xlane.xlu0 %1070
        %v1072 = vrcp.pop 32.0
        %v1073 = vmul.f32 32.0, %v1072
        %v1074 = vsub.f32 1.0, %v1073
        %v1075 = vmul.f32 %v1072, %v1074
        %v1076 = vadd.f32 %v1072, %v1075
        %vm1077 = vweird.f32 %v1072
        %v1078 = vsel %vm1077, %v1072, %v1076
        %v1079 = vmul.f32 %v1071, %v1078
        %v1080 = vsub.f32 %v1066, %v1079
        %v1081 = vmul.f32 %v1080, %v1080
        %v1082 = vsel %vm762, %v1081, 0.0
        %1083 = vadd.xlane.f32.xlu0 %v1082
        %v1084 = vpop.xlane.xlu0 %1083
        %v1085 = vmul.f32 %v1084, %v1078
        %v1086 = vadd.f32 %v1085, 1e-05
        %v1087 = vrsqrt.pop %v1086
        %v1088 = vmul.f32 %v1087, %v1086
        %v1089 = vmul.f32 %v1088, %v1087
        %v1090 = vmul.f32 0.5, %v1089
        %v1091 = vsub.f32 1.5, %v1090
        %v1092 = vmul.f32 %v1087, %v1091
        %vm1093 = vweird.f32 %v1086
        %vm1094 = vweird.f32 %v1087
        %vm1095 = vmor %vm1093, %vm1094
        %v1096 = vsel %vm1095, %v1087, %v1092
        %v1097 = vmul.f32 %v1080, %v1096
        %v1099 = vperm.slane %v1067, 0
        %v1101 = vmul.f32 %v1097, %v1099
        %v1103 = vperm.slane %v1068, 0
        %v1105 = vadd.f32 %v1101, %v1103
        %v1106 = vpack.c.bf16 %v1105, %v1105
        %v1107 = vld [vmem:[%s6] sm:$0xf]
        %v1108 = vld [vmem:[%s6 + $0x4] sm:$0xf]
        %v1109 = vld [vmem:[%s6 + $0x8] sm:$0xf]
        %v1110 = vld [vmem:[%s6 + $0xc] sm:$0xf]
        %v1111 = vld [vmem:[%s7] sm:$0x1]
        %v1113 = vperm.slane %v1111, 0
        %v1119 = vunpack.c.l.b16 %v1107
        %v1120 = vunpack.c.l.b16 %v1108
        %v1121 = vunpack.c.l.b16 %v1109
        %v1122 = vunpack.c.l.b16 %v1110
        %v1123 = vpack.c.b16 %v1120, %v1119
        %v1124 = vpack.c.b16 %v1122, %v1121
        %v1128 = vsel %vm762, %v1106, 0
        %1130 = vmatpush.bf16.msra.mxu0 0
        %1131 = vmatpush.bf16.msra.mxu0 0
        %1132 = vmatpush.bf16.msra.mxu0 0
        %1133 = vmatpush.bf16.msra.mxu0 0
        %1134 = vmatpush.bf16.msra.mxu0 0
        %1135 = vmatpush.bf16.msra.mxu0 0
        %1136 = vmatpush.bf16.msra.mxu0 %v1124
        %1137 = vmatpush.bf16.msra.mxu0 %v1123
        %1138 = vmatmul.bf16.gmra.mxu0 %v1128
        %v1139 = vpop.f32.mrf.mxu0
        %v1140 = vadd.f32 %v1113, %v1139
        %v1141 = vpop.f32.mrf.mxu0
        %1142 = vdwg.mxu0
        %v1143 = vpack.c.bf16 %v740, %v739
        %v1144 = vld [vmem:[%s8] sm:$0xf]
        %v1145 = vld [vmem:[%s8 + $0x4] sm:$0xf]
        %v1146 = vld [vmem:[%s8 + $0x8] sm:$0xf]
        %v1147 = vld [vmem:[%s8 + $0xc] sm:$0xf]
        %v1148 = vld [vmem:[%s9] sm:$0x1]
        %v1150 = vperm.slane %v1148, 0
        %v1156 = vunpack.c.l.b16 %v1144
        %v1157 = vunpack.c.l.b16 %v1145
        %v1158 = vunpack.c.l.b16 %v1146
        %v1159 = vunpack.c.l.b16 %v1147
        %v1160 = vpack.c.b16 %v1157, %v1156
        %v1161 = vpack.c.b16 %v1159, %v1158
        %v1165 = vsel %vm762, %v1143, 0
        %1167 = vmatpush.bf16.msra.mxu0 0
        %1168 = vmatpush.bf16.msra.mxu0 0
        %1169 = vmatpush.bf16.msra.mxu0 0
        %1170 = vmatpush.bf16.msra.mxu0 0
        %1171 = vmatpush.bf16.msra.mxu0 0
        %1172 = vmatpush.bf16.msra.mxu0 0
        %1173 = vmatpush.bf16.msra.mxu0 %v1161
        %1174 = vmatpush.bf16.msra.mxu0 %v1160
        %1175 = vmatmul.bf16.gmra.mxu0 %v1165
        %v1176 = vpop.f32.mrf.mxu0
        %v1177 = vadd.f32 %v1150, %v1176
        %v1178 = vpop.f32.mrf.mxu0
        %v1179 = vadd.f32 %v1150, %v1178
        %1180 = vdwg.mxu0
        %v1181 = vmul.f32 %v1140, 0.35355338
        %v1182 = vpack.c.bf16 %v1181, %v1181
        %v1183 = vpack.c.bf16 %v1177, %v1177
        %v1184 = vpack.c.bf16 %v1179, %v1179
        %v1187 = vunpack.c.l.b16 %v1183
        %v1188 = vunpack.c.l.b16 %v1184
        %v1189 = vpack.c.b16 %v1188, %v1187
        %v1191 = vsel %vm787, %v1182, 0
        %v1194 = vsel %vm787, %v1189, 0
        %1196 = vmatpush.bf16.xpose.msra.mxu0 0
        %1197 = vmatpush.bf16.xpose.msra.mxu0 0
        %1198 = vmatpush.bf16.xpose.msra.mxu0 0
        %1199 = vmatpush.bf16.xpose.msra.mxu0 0
        %1200 = vmatpush.bf16.xpose.msra.mxu0 0
        %1201 = vmatpush.bf16.xpose.msra.mxu0 0
        %1202 = vmatpush.bf16.xpose.msra.mxu0 0
        %1203 = vmatpush.bf16.xpose.msra.mxu0 %v1194
        %1204 = vmatmul.bf16.gmra.mxu0 %v1191
        %v1205 = vpop.f32.mrf.mxu0
        %v1206 = vadd.f32 0.0, %v1205
        %v1207 = vpop.f32.mrf.mxu0
        %1208 = vdwg.mxu0
        %v1209 = vsel %vm1025, %v1206, -inf
        %1210 = vmax.xlane.f32.xlu0 %v1209
        %v1211 = vpop.xlane.xlu0 %1210
        %v1212 = vsub.f32 %v1206, %v1211
        %v1213 = vmul.f32 %v1212, 1.442695
        %v1214 = vpow.pop %v1213
        %v1215 = vsel %vm1025, %v1214, 0.0
        %1216 = vadd.xlane.f32.xlu0 %v1215
        %v1217 = vpop.xlane.xlu0 %1216
        %v1218 = vrcp.pop %v1217
        %v1219 = vmul.f32 %v1217, %v1218
        %v1220 = vsub.f32 1.0, %v1219
        %v1221 = vmul.f32 %v1218, %v1220
        %v1222 = vadd.f32 %v1218, %v1221
        %vm1223 = vweird.f32 %v1217
        %vm1224 = vweird.f32 %v1218
        %vm1225 = vmor %vm1223, %vm1224
        %v1226 = vsel %vm1225, %v1218, %v1222
        %v1227 = vand.u32 2147483647, %v1217
        %vm1228 = vcmp.eq.f32.partialorder %v1227, 8.507059e+37
        %v1229 = vand.u32 %v1217, 2147483648
        %v1230 = vor.u32 1.1754944e-38, %v1229
        %v1231 = vsel %vm1228, %v1230, %v1226
        %v1232 = vmul.f32 %v1214, %v1231
        %v1233 = vpack.c.bf16 %v1232, %v1232
        %1234 = vrot.lane.b32.xlu0 %v1189, 96
        %v1235 = vpop.permute.xlu0 %1234
        %v1238 = vsel %vm1025, %v1233, 0
        %1240 = vmatpush.bf16.msra.mxu0 0
        %1241 = vmatpush.bf16.msra.mxu0 0
        %1242 = vmatpush.bf16.msra.mxu0 0
        %1243 = vmatpush.bf16.msra.mxu0 0
        %1244 = vmatpush.bf16.msra.mxu0 0
        %1245 = vmatpush.bf16.msra.mxu0 0
        %1246 = vmatpush.bf16.msra.mxu0 0
        %1247 = vmatpush.bf16.msra.mxu0 %v1235
        %1248 = vmatmul.bf16.gmra.mxu0 %v1238
        %v1249 = vpop.f32.mrf.mxu0
        %v1250 = vadd.f32 0.0, %v1249
        %v1251 = vpop.f32.mrf.mxu0
        %1252 = vdwg.mxu0
        %v1254 = vunpack.c.l.b16 %v1182
        %v1255 = vpack.c.b16 %v1254, %v1254
        %1256 = vrot.lane.b32.xlu0 %v1255, 120
        %v1257 = vpop.permute.xlu0 %1256
        %1258 = vrot.lane.b32.xlu0 %v1189, 120
        %v1259 = vpop.permute.xlu0 %1258
        %v1261 = vsel %vm787, %v1257, 0
        %v1264 = vsel %vm787, %v1259, 0
        %1266 = vmatpush.bf16.xpose.msra.mxu0 0
        %1267 = vmatpush.bf16.xpose.msra.mxu0 0
        %1268 = vmatpush.bf16.xpose.msra.mxu0 0
        %1269 = vmatpush.bf16.xpose.msra.mxu0 0
        %1270 = vmatpush.bf16.xpose.msra.mxu0 0
        %1271 = vmatpush.bf16.xpose.msra.mxu0 0
        %1272 = vmatpush.bf16.xpose.msra.mxu0 0
        %1273 = vmatpush.bf16.xpose.msra.mxu0 %v1264
        %1274 = vmatmul.bf16.gmra.mxu0 %v1261
        %v1275 = vpop.f32.mrf.mxu0
        %v1276 = vadd.f32 0.0, %v1275
        %v1277 = vpop.f32.mrf.mxu0
        %1278 = vdwg.mxu0
        %v1279 = vsel %vm1025, %v1276, -inf
        %1280 = vmax.xlane.f32.xlu0 %v1279
        %v1281 = vpop.xlane.xlu0 %1280
        %v1282 = vsub.f32 %v1276, %v1281
        %v1283 = vmul.f32 %v1282, 1.442695
        %v1284 = vpow.pop %v1283
        %v1285 = vsel %vm1025, %v1284, 0.0
        %1286 = vadd.xlane.f32.xlu0 %v1285
        %v1287 = vpop.xlane.xlu0 %1286
        %v1288 = vrcp.pop %v1287
        %v1289 = vmul.f32 %v1287, %v1288
        %v1290 = vsub.f32 1.0, %v1289
        %v1291 = vmul.f32 %v1288, %v1290
        %v1292 = vadd.f32 %v1288, %v1291
        %vm1293 = vweird.f32 %v1287
        %vm1294 = vweird.f32 %v1288
        %vm1295 = vmor %vm1293, %vm1294
        %v1296 = vsel %vm1295, %v1288, %v1292
        %v1297 = vand.u32 2147483647, %v1287
        %vm1298 = vcmp.eq.f32.partialorder %v1297, 8.507059e+37
        %v1299 = vand.u32 %v1287, 2147483648
        %v1300 = vor.u32 1.1754944e-38, %v1299
        %v1301 = vsel %vm1298, %v1300, %v1296
        %v1302 = vmul.f32 %v1284, %v1301
        %v1303 = vadd.f32 %v1232, %v1302
        %v1304 = vpack.c.bf16 %v1302, %v1302
        %1305 = vrot.lane.b32.xlu0 %v1189, 88
        %v1306 = vpop.permute.xlu0 %1305
        %v1309 = vsel %vm1025, %v1304, 0
        %1311 = vmatpush.bf16.msra.mxu0 0
        %1312 = vmatpush.bf16.msra.mxu0 0
        %1313 = vmatpush.bf16.msra.mxu0 0
        %1314 = vmatpush.bf16.msra.mxu0 0
        %1315 = vmatpush.bf16.msra.mxu0 0
        %1316 = vmatpush.bf16.msra.mxu0 0
        %1317 = vmatpush.bf16.msra.mxu0 0
        %1318 = vmatpush.bf16.msra.mxu0 %v1306
        %1319 = vmatmul.bf16.gmra.mxu0 %v1309
        %v1320 = vpop.f32.mrf.mxu0
        %v1321 = vadd.f32 0.0, %v1320
        %v1322 = vpop.f32.mrf.mxu0
        %1323 = vdwg.mxu0
        %1324 = vrot.lane.b32.xlu0 %v1255, 112
        %v1325 = vpop.permute.xlu0 %1324
        %1326 = vrot.lane.b32.xlu0 %v1189, 112
        %v1327 = vpop.permute.xlu0 %1326
        %v1329 = vsel %vm787, %v1325, 0
        %v1332 = vsel %vm787, %v1327, 0
        %1334 = vmatpush.bf16.xpose.msra.mxu0 0
        %1335 = vmatpush.bf16.xpose.msra.mxu0 0
        %1336 = vmatpush.bf16.xpose.msra.mxu0 0
        %1337 = vmatpush.bf16.xpose.msra.mxu0 0
        %1338 = vmatpush.bf16.xpose.msra.mxu0 0
        %1339 = vmatpush.bf16.xpose.msra.mxu0 0
        %1340 = vmatpush.bf16.xpose.msra.mxu0 0
        %1341 = vmatpush.bf16.xpose.msra.mxu0 %v1332
        %1342 = vmatmul.bf16.gmra.mxu0 %v1329
        %v1343 = vpop.f32.mrf.mxu0
        %v1344 = vadd.f32 0.0, %v1343
        %v1345 = vpop.f32.mrf.mxu0
        %1346 = vdwg.mxu0
        %v1347 = vsel %vm1025, %v1344, -inf
        %1348 = vmax.xlane.f32.xlu0 %v1347
        %v1349 = vpop.xlane.xlu0 %1348
        %v1350 = vsub.f32 %v1344, %v1349
        %v1351 = vmul.f32 %v1350, 1.442695
        %v1352 = vpow.pop %v1351
        %v1353 = vsel %vm1025, %v1352, 0.0
        %1354 = vadd.xlane.f32.xlu0 %v1353
        %v1355 = vpop.xlane.xlu0 %1354
        %v1356 = vrcp.pop %v1355
        %v1357 = vmul.f32 %v1355, %v1356
        %v1358 = vsub.f32 1.0, %v1357
        %v1359 = vmul.f32 %v1356, %v1358
        %v1360 = vadd.f32 %v1356, %v1359
        %vm1361 = vweird.f32 %v1355
        %vm1362 = vweird.f32 %v1356
        %vm1363 = vmor %vm1361, %vm1362
        %v1364 = vsel %vm1363, %v1356, %v1360
        %v1365 = vand.u32 2147483647, %v1355
        %vm1366 = vcmp.eq.f32.partialorder %v1365, 8.507059e+37
        %v1367 = vand.u32 %v1355, 2147483648
        %v1368 = vor.u32 1.1754944e-38, %v1367
        %v1369 = vsel %vm1366, %v1368, %v1364
        %v1370 = vmul.f32 %v1352, %v1369
        %v1371 = vadd.f32 %v1303, %v1370
        %v1372 = vpack.c.bf16 %v1370, %v1370
        %1373 = vrot.lane.b32.xlu0 %v1189, 80
        %v1374 = vpop.permute.xlu0 %1373
        %v1377 = vsel %vm1025, %v1372, 0
        %1379 = vmatpush.bf16.msra.mxu0 0
        %1380 = vmatpush.bf16.msra.mxu0 0
        %1381 = vmatpush.bf16.msra.mxu0 0
        %1382 = vmatpush.bf16.msra.mxu0 0
        %1383 = vmatpush.bf16.msra.mxu0 0
        %1384 = vmatpush.bf16.msra.mxu0 0
        %1385 = vmatpush.bf16.msra.mxu0 0
        %1386 = vmatpush.bf16.msra.mxu0 %v1374
        %1387 = vmatmul.bf16.gmra.mxu0 %v1377
        %v1388 = vpop.f32.mrf.mxu0
        %v1389 = vadd.f32 0.0, %v1388
        %v1390 = vpop.f32.mrf.mxu0
        %1391 = vdwg.mxu0
        %1392 = vrot.lane.b32.xlu0 %v1255, 104
        %v1393 = vpop.permute.xlu0 %1392
        %1394 = vrot.lane.b32.xlu0 %v1189, 104
        %v1395 = vpop.permute.xlu0 %1394
        %v1397 = vsel %vm787, %v1393, 0
        %v1400 = vsel %vm787, %v1395, 0
        %1402 = vmatpush.bf16.xpose.msra.mxu0 0
        %1403 = vmatpush.bf16.xpose.msra.mxu0 0
        %1404 = vmatpush.bf16.xpose.msra.mxu0 0
        %1405 = vmatpush.bf16.xpose.msra.mxu0 0
        %1406 = vmatpush.bf16.xpose.msra.mxu0 0
        %1407 = vmatpush.bf16.xpose.msra.mxu0 0
        %1408 = vmatpush.bf16.xpose.msra.mxu0 0
        %1409 = vmatpush.bf16.xpose.msra.mxu0 %v1400
        %1410 = vmatmul.bf16.gmra.mxu0 %v1397
        %v1411 = vpop.f32.mrf.mxu0
        %v1412 = vadd.f32 0.0, %v1411
        %v1413 = vpop.f32.mrf.mxu0
        %1414 = vdwg.mxu0
        %v1415 = vsel %vm1025, %v1412, -inf
        %1416 = vmax.xlane.f32.xlu0 %v1415
        %v1417 = vpop.xlane.xlu0 %1416
        %v1418 = vsub.f32 %v1412, %v1417
        %v1419 = vmul.f32 %v1418, 1.442695
        %v1420 = vpow.pop %v1419
        %v1421 = vsel %vm1025, %v1420, 0.0
        %1422 = vadd.xlane.f32.xlu0 %v1421
        %v1423 = vpop.xlane.xlu0 %1422
        %v1424 = vrcp.pop %v1423
        %v1425 = vmul.f32 %v1423, %v1424
        %v1426 = vsub.f32 1.0, %v1425
        %v1427 = vmul.f32 %v1424, %v1426
        %v1428 = vadd.f32 %v1424, %v1427
        %vm1429 = vweird.f32 %v1423
        %vm1430 = vweird.f32 %v1424
        %vm1431 = vmor %vm1429, %vm1430
        %v1432 = vsel %vm1431, %v1424, %v1428
        %v1433 = vand.u32 2147483647, %v1423
        %vm1434 = vcmp.eq.f32.partialorder %v1433, 8.507059e+37
        %v1435 = vand.u32 %v1423, 2147483648
        %v1436 = vor.u32 1.1754944e-38, %v1435
        %v1437 = vsel %vm1434, %v1436, %v1432
        %v1438 = vmul.f32 %v1420, %v1437
        %v1439 = vadd.f32 %v1371, %v1438
        %v1440 = vpack.c.bf16 %v1438, %v1438
        %1441 = vrot.lane.b32.xlu0 %v1189, 72
        %v1442 = vpop.permute.xlu0 %1441
        %v1445 = vsel %vm1025, %v1440, 0
        %1447 = vmatpush.bf16.msra.mxu0 0
        %1448 = vmatpush.bf16.msra.mxu0 0
        %1449 = vmatpush.bf16.msra.mxu0 0
        %1450 = vmatpush.bf16.msra.mxu0 0
        %1451 = vmatpush.bf16.msra.mxu0 0
        %1452 = vmatpush.bf16.msra.mxu0 0
        %1453 = vmatpush.bf16.msra.mxu0 0
        %1454 = vmatpush.bf16.msra.mxu0 %v1442
        %1455 = vmatmul.bf16.gmra.mxu0 %v1445
        %v1456 = vpop.f32.mrf.mxu0
        %v1457 = vadd.f32 0.0, %v1456
        %v1458 = vpop.f32.mrf.mxu0
        %1459 = vdwg.mxu0
        %1461 = vrot.lane.b32.xlu0 %v1321, 8
        %v1462 = vpop.permute.xlu0 %1461
        %1465 = vrot.lane.b32.xlu0 %v1389, 16
        %v1466 = vpop.permute.xlu0 %1465
        %1469 = vrot.lane.b32.xlu0 %v1457, 24
        %v1470 = vpop.permute.xlu0 %1469
        %v1472 = vsel %vm787, %v1250, %v1462
        %v1473 = vsel %vm1025, %v1472, %v1466
        %v1474 = vsel %vm1027, %v1473, %v1470
        %v1475 = vpack.c.bf16 %v1474, %v1474
        %v1476 = vld [vmem:[%s10] sm:$0xf]
        %v1477 = vld [vmem:[%s10 + $0x4] sm:$0xf]
        %v1478 = vld [vmem:[%s10 + $0x8] sm:$0xf]
        %v1479 = vld [vmem:[%s10 + $0xc] sm:$0xf]
        %v1480 = vld [vmem:[%s11] sm:$0x1]
        %v1482 = vperm.slane %v1480, 0
        %v1488 = vunpack.c.l.b16 %v1476
        %v1489 = vunpack.c.l.b16 %v1477
        %v1490 = vunpack.c.l.b16 %v1478
        %v1491 = vunpack.c.l.b16 %v1479
        %v1492 = vpack.c.b16 %v1489, %v1488
        %v1493 = vpack.c.b16 %v1491, %v1490
        %v1497 = vsel %vm762, %v1475, 0
        %1499 = vmatpush.bf16.msra.mxu0 0
        %1500 = vmatpush.bf16.msra.mxu0 0
        %1501 = vmatpush.bf16.msra.mxu0 0
        %1502 = vmatpush.bf16.msra.mxu0 0
        %1503 = vmatpush.bf16.msra.mxu0 0
        %1504 = vmatpush.bf16.msra.mxu0 0
        %1505 = vmatpush.bf16.msra.mxu0 %v1493
        %1506 = vmatpush.bf16.msra.mxu0 %v1492
        %1507 = vmatmul.bf16.gmra.mxu0 %v1497
        %v1508 = vpop.f32.mrf.mxu0
        %v1509 = vadd.f32 %v1482, %v1508
        %v1510 = vpop.f32.mrf.mxu0
        %1511 = vdwg.mxu0
        %v1512 = vmul.f32 %v1439, 0.25
        %1513 = vst.msk [vmem:[%s727] sm:$0xff] %vm1025, %v1512
        %v1514 = vadd.f32 %v1105, %v1509
        %v1515 = vld [vmem:[%s18] sm:$0x1]
        %v1516 = vld [vmem:[%s19] sm:$0x1]
        %v1517 = vsel %vm762, %v1514, 0.0
        %1518 = vadd.xlane.f32.xlu0 %v1517
        %v1519 = vpop.xlane.xlu0 %1518
        %v1520 = vmul.f32 %v1519, %v1078
        %v1521 = vsub.f32 %v1514, %v1520
        %v1522 = vmul.f32 %v1521, %v1521
        %v1523 = vsel %vm762, %v1522, 0.0
        %1524 = vadd.xlane.f32.xlu0 %v1523
        %v1525 = vpop.xlane.xlu0 %1524
        %v1526 = vmul.f32 %v1525, %v1078
        %v1527 = vadd.f32 %v1526, 1e-05
        %v1528 = vrsqrt.pop %v1527
        %v1529 = vmul.f32 %v1528, %v1527
        %v1530 = vmul.f32 %v1529, %v1528
        %v1531 = vmul.f32 0.5, %v1530
        %v1532 = vsub.f32 1.5, %v1531
        %v1533 = vmul.f32 %v1528, %v1532
        %vm1534 = vweird.f32 %v1527
        %vm1535 = vweird.f32 %v1528
        %vm1536 = vmor %vm1534, %vm1535
        %v1537 = vsel %vm1536, %v1528, %v1533
        %v1538 = vmul.f32 %v1521, %v1537
        %v1540 = vperm.slane %v1515, 0
        %v1542 = vmul.f32 %v1538, %v1540
        %v1544 = vperm.slane %v1516, 0
        %v1546 = vadd.f32 %v1542, %v1544
        %v1548 = vrot.slane %v1546, 4
        %v1550 = vsel %vm824, 0.0, %v1548
        %v1551 = vsel %vm824, %v1548, 0.0
        %vm1554 = vcmask 1046528
        %v1555 = vrot.slane %v1550, 1
        %v1556 = vrot.slane %v1551, 1
        %v1557 = vsel %vm1554, %v1555, %v1556
        %1558 = vrot.lane.b32.xlu0 %v1557, 32
        %v1559 = vpop.permute.xlu0 %1558
        %vm1561 = vcmask 1045504
        %v1562 = vrot.slane %v1550, 2
        %v1563 = vrot.slane %v1551, 2
        %v1564 = vsel %vm1561, %v1562, %v1563
        %1565 = vrot.lane.b32.xlu0 %v1564, 64
        %v1566 = vpop.permute.xlu0 %1565
        %vm1568 = vcmask 1044480
        %v1569 = vrot.slane %v1550, 3
        %v1570 = vrot.slane %v1551, 3
        %v1571 = vsel %vm1568, %v1569, %v1570
        %1572 = vrot.lane.b32.xlu0 %v1571, 96
        %v1573 = vpop.permute.xlu0 %1572
        %v1575 = vrot.slane %v1550, 4
        %v1576 = vrot.slane %v1551, 4
        %v1577 = vsel %vm824, %v1575, %v1576
        %vm1579 = vcmask 1042432
        %v1580 = vrot.slane %v1550, 5
        %v1581 = vrot.slane %v1551, 5
        %v1582 = vsel %vm1579, %v1580, %v1581
        %1583 = vrot.lane.b32.xlu0 %v1582, 32
        %v1584 = vpop.permute.xlu0 %1583
        %vm1586 = vcmask 1041408
        %v1587 = vrot.slane %v1550, 6
        %v1588 = vrot.slane %v1551, 6
        %v1589 = vsel %vm1586, %v1587, %v1588
        %1590 = vrot.lane.b32.xlu0 %v1589, 64
        %v1591 = vpop.permute.xlu0 %1590
        %vm1593 = vcmask 1040384
        %v1594 = vrot.slane %v1550, 7
        %v1595 = vrot.slane %v1551, 7
        %v1596 = vsel %vm1593, %v1594, %v1595
        %1597 = vrot.lane.b32.xlu0 %v1596, 96
        %v1598 = vpop.permute.xlu0 %1597
        %v1600 = vsel %vm762, %v1550, %v1559
        %vm1601 = vcmask 523264
        %v1602 = vsel %vm1601, %v1600, %v1566
        %vm1603 = vcmask 785408
        %v1604 = vsel %vm1603, %v1602, %v1573
        %v1605 = vsel %vm762, %v1577, %v1584
        %v1606 = vsel %vm1601, %v1605, %v1591
        %v1607 = vsel %vm1603, %v1606, %v1598
        %v1608 = vpack.c.bf16 %v1604, %v1604
        %v1609 = vpack.c.bf16 %v1607, %v1607
        %v1610 = vpack.c.bf16 %v1551, %v1551
        %v1611 = vld [vmem:[%s12] sm:$0xf]
        %v1612 = vld [vmem:[%s12 + $0x4] sm:$0xf]
        %v1613 = vld [vmem:[%s12 + $0x8] sm:$0xf]
        %v1614 = vld [vmem:[%s12 + $0xc] sm:$0xf]
        %v1615 = vld [vmem:[%s12 + $0x10] sm:$0xf]
        %v1616 = vld [vmem:[%s12 + $0x14] sm:$0xf]
        %v1617 = vld [vmem:[%s12 + $0x18] sm:$0xf]
        %v1618 = vld [vmem:[%s12 + $0x1c] sm:$0xf]
        %v1619 = vld [vmem:[%s12 + $0x20] sm:$0xf]
        %v1620 = vld [vmem:[%s12 + $0x24] sm:$0xf]
        %v1621 = vld [vmem:[%s12 + $0x28] sm:$0xf]
        %v1622 = vld [vmem:[%s12 + $0x2c] sm:$0xf]
        %v1623 = vld [vmem:[%s12 + $0x30] sm:$0xf]
        %v1624 = vld [vmem:[%s12 + $0x34] sm:$0xf]
        %v1625 = vld [vmem:[%s12 + $0x38] sm:$0xf]
        %v1626 = vld [vmem:[%s12 + $0x3c] sm:$0xf]
        %v1627 = vld [vmem:[%s12 + $0x40] sm:$0xf]
        %v1628 = vld [vmem:[%s12 + $0x44] sm:$0xf]
        %v1629 = vld [vmem:[%s12 + $0x48] sm:$0xf]
        %v1630 = vld [vmem:[%s12 + $0x4c] sm:$0xf]
        %v1631 = vld [vmem:[%s12 + $0x50] sm:$0xf]
        %v1632 = vld [vmem:[%s12 + $0x54] sm:$0xf]
        %v1633 = vld [vmem:[%s12 + $0x58] sm:$0xf]
        %v1634 = vld [vmem:[%s12 + $0x5c] sm:$0xf]
        %v1635 = vld [vmem:[%s12 + $0x60] sm:$0xf]
        %v1636 = vld [vmem:[%s12 + $0x64] sm:$0xf]
        %v1637 = vld [vmem:[%s12 + $0x68] sm:$0xf]
        %v1638 = vld [vmem:[%s12 + $0x6c] sm:$0xf]
        %v1639 = vld [vmem:[%s12 + $0x70] sm:$0xf]
        %v1640 = vld [vmem:[%s12 + $0x74] sm:$0xf]
        %v1641 = vld [vmem:[%s12 + $0x78] sm:$0xf]
        %v1642 = vld [vmem:[%s12 + $0x7c] sm:$0xf]
        %v1643 = vld [vmem:[%s12 + $0x80] sm:$0xf]
        %v1644 = vld [vmem:[%s12 + $0x84] sm:$0xf]
        %v1645 = vld [vmem:[%s12 + $0x88] sm:$0xf]
        %v1646 = vld [vmem:[%s12 + $0x8c] sm:$0xf]
        %v1647 = vld [vmem:[%s13] sm:$0x1]
        %v1649 = vperm.slane %v1647, 0
        %v1687 = vunpack.c.l.b16 %v1611
        %v1688 = vunpack.c.l.b16 %v1612
        %v1689 = vunpack.c.l.b16 %v1613
        %v1690 = vunpack.c.l.b16 %v1614
        %v1691 = vunpack.c.l.b16 %v1615
        %v1692 = vunpack.c.l.b16 %v1616
        %v1693 = vunpack.c.l.b16 %v1617
        %v1694 = vunpack.c.l.b16 %v1618
        %v1695 = vunpack.c.l.b16 %v1619
        %v1696 = vunpack.c.l.b16 %v1620
        %v1697 = vunpack.c.l.b16 %v1621
        %v1698 = vunpack.c.l.b16 %v1622
        %v1699 = vunpack.c.l.b16 %v1623
        %v1700 = vunpack.c.l.b16 %v1624
        %v1701 = vunpack.c.l.b16 %v1625
        %v1702 = vunpack.c.l.b16 %v1626
        %v1703 = vunpack.c.l.b16 %v1627
        %v1704 = vunpack.c.l.b16 %v1628
        %v1705 = vunpack.c.l.b16 %v1629
        %v1706 = vunpack.c.l.b16 %v1630
        %v1707 = vunpack.c.l.b16 %v1631
        %v1708 = vunpack.c.l.b16 %v1632
        %v1709 = vunpack.c.l.b16 %v1633
        %v1710 = vunpack.c.l.b16 %v1634
        %v1711 = vunpack.c.l.b16 %v1635
        %v1712 = vunpack.c.l.b16 %v1636
        %v1713 = vunpack.c.l.b16 %v1637
        %v1714 = vunpack.c.l.b16 %v1638
        %v1715 = vunpack.c.l.b16 %v1639
        %v1716 = vunpack.c.l.b16 %v1640
        %v1717 = vunpack.c.l.b16 %v1641
        %v1718 = vunpack.c.l.b16 %v1642
        %v1719 = vunpack.c.l.b16 %v1643
        %v1720 = vunpack.c.l.b16 %v1644
        %v1721 = vunpack.c.l.b16 %v1645
        %v1722 = vunpack.c.l.b16 %v1646
        %v1723 = vpack.c.b16 %v1688, %v1687
        %v1724 = vpack.c.b16 %v1690, %v1689
        %v1725 = vpack.c.b16 %v1692, %v1691
        %v1726 = vpack.c.b16 %v1694, %v1693
        %v1727 = vpack.c.b16 %v1696, %v1695
        %v1728 = vpack.c.b16 %v1698, %v1697
        %v1729 = vpack.c.b16 %v1700, %v1699
        %v1730 = vpack.c.b16 %v1702, %v1701
        %v1731 = vpack.c.b16 %v1704, %v1703
        %v1732 = vpack.c.b16 %v1706, %v1705
        %v1733 = vpack.c.b16 %v1708, %v1707
        %v1734 = vpack.c.b16 %v1710, %v1709
        %v1735 = vpack.c.b16 %v1712, %v1711
        %v1736 = vpack.c.b16 %v1714, %v1713
        %v1737 = vpack.c.b16 %v1716, %v1715
        %v1738 = vpack.c.b16 %v1718, %v1717
        %v1739 = vpack.c.b16 %v1720, %v1719
        %v1740 = vpack.c.b16 %v1722, %v1721
        %v1760 = vsel %vm762, %v1610, 0
        %1762 = vmatpush.bf16.msra.mxu0 %v1730
        %1763 = vmatpush.bf16.msra.mxu0 %v1729
        %1764 = vmatpush.bf16.msra.mxu0 %v1728
        %1765 = vmatpush.bf16.msra.mxu0 %v1727
        %1766 = vmatpush.bf16.msra.mxu0 %v1726
        %1767 = vmatpush.bf16.msra.mxu0 %v1725
        %1768 = vmatpush.bf16.msra.mxu0 %v1724
        %1769 = vmatpush.bf16.msra.mxu0 %v1723
        %1770 = vmatmul.bf16.gmra.mxu0 %v1608
        %v1771 = vpop.f32.mrf.mxu0
        %v1772 = vadd.f32 %v1649, %v1771
        %v1773 = vpop.f32.mrf.mxu0
        %1774 = vdwg.mxu0
        %1775 = vmatpush.bf16.msra.mxu0 %v1738
        %1776 = vmatpush.bf16.msra.mxu0 %v1737
        %1777 = vmatpush.bf16.msra.mxu0 %v1736
        %1778 = vmatpush.bf16.msra.mxu0 %v1735
        %1779 = vmatpush.bf16.msra.mxu0 %v1734
        %1780 = vmatpush.bf16.msra.mxu0 %v1733
        %1781 = vmatpush.bf16.msra.mxu0 %v1732
        %1782 = vmatpush.bf16.msra.mxu0 %v1731
        %1783 = vmatmul.bf16.gmra.mxu0 %v1609
        %v1784 = vpop.f32.mrf.mxu0
        %v1785 = vadd.f32 %v1772, %v1784
        %v1786 = vpop.f32.mrf.mxu0
        %1787 = vdwg.mxu0
        %1788 = vmatpush.bf16.msra.mxu0 0
        %1789 = vmatpush.bf16.msra.mxu0 0
        %1790 = vmatpush.bf16.msra.mxu0 0
        %1791 = vmatpush.bf16.msra.mxu0 0
        %1792 = vmatpush.bf16.msra.mxu0 0
        %1793 = vmatpush.bf16.msra.mxu0 0
        %1794 = vmatpush.bf16.msra.mxu0 %v1740
        %1795 = vmatpush.bf16.msra.mxu0 %v1739
        %1796 = vmatmul.bf16.gmra.mxu0 %v1760
        %v1797 = vpop.f32.mrf.mxu0
        %v1798 = vadd.f32 %v1785, %v1797
        %v1799 = vpop.f32.mrf.mxu0
        %1800 = vdwg.mxu0
        %v1801 = vmax.f32 %v1798, 0.0
        %v1802 = vpack.c.bf16 %v1801, %v1801
        %v1803 = vld [vmem:[%s14] sm:$0xf]
        %v1804 = vld [vmem:[%s14 + $0x4] sm:$0xf]
        %v1805 = vld [vmem:[%s14 + $0x8] sm:$0xf]
        %v1806 = vld [vmem:[%s14 + $0xc] sm:$0xf]
        %v1807 = vld [vmem:[%s14 + $0x10] sm:$0xf]
        %v1808 = vld [vmem:[%s14 + $0x14] sm:$0xf]
        %v1809 = vld [vmem:[%s14 + $0x18] sm:$0xf]
        %v1810 = vld [vmem:[%s14 + $0x1c] sm:$0xf]
        %v1811 = vld [vmem:[%s15] sm:$0x1]
        %v1813 = vperm.slane %v1811, 0
        %v1823 = vunpack.c.l.b16 %v1803
        %v1824 = vunpack.c.l.b16 %v1804
        %v1825 = vunpack.c.l.b16 %v1805
        %v1826 = vunpack.c.l.b16 %v1806
        %v1827 = vunpack.c.l.b16 %v1807
        %v1828 = vunpack.c.l.b16 %v1808
        %v1829 = vunpack.c.l.b16 %v1809
        %v1830 = vunpack.c.l.b16 %v1810
        %v1831 = vpack.c.b16 %v1824, %v1823
        %v1832 = vpack.c.b16 %v1826, %v1825
        %v1833 = vpack.c.b16 %v1828, %v1827
        %v1834 = vpack.c.b16 %v1830, %v1829
        %v1840 = vsel %vm1601, %v1802, 0
        %1842 = vmatpush.bf16.msra.mxu0 0
        %1843 = vmatpush.bf16.msra.mxu0 0
        %1844 = vmatpush.bf16.msra.mxu0 0
        %1845 = vmatpush.bf16.msra.mxu0 0
        %1846 = vmatpush.bf16.msra.mxu0 %v1834
        %1847 = vmatpush.bf16.msra.mxu0 %v1833
        %1848 = vmatpush.bf16.msra.mxu0 %v1832
        %1849 = vmatpush.bf16.msra.mxu0 %v1831
        %1850 = vmatmul.bf16.gmra.mxu0 %v1840
        %v1851 = vpop.f32.mrf.mxu0
        %v1852 = vadd.f32 %v1813, %v1851
        %v1853 = vpop.f32.mrf.mxu0
        %1854 = vdwg.mxu0
        %v1855 = vadd.f32 %v1546, %v1852
        %v1856 = vld [vmem:[%s20] sm:$0x1]
        %v1857 = vld [vmem:[%s21] sm:$0x1]
        %v1858 = vsel %vm762, %v1855, 0.0
        %1859 = vadd.xlane.f32.xlu0 %v1858
        %v1860 = vpop.xlane.xlu0 %1859
        %v1861 = vmul.f32 %v1860, %v1078
        %v1862 = vsub.f32 %v1855, %v1861
        %v1863 = vmul.f32 %v1862, %v1862
        %v1864 = vsel %vm762, %v1863, 0.0
        %1865 = vadd.xlane.f32.xlu0 %v1864
        %v1866 = vpop.xlane.xlu0 %1865
        %v1867 = vmul.f32 %v1866, %v1078
        %v1868 = vadd.f32 %v1867, 1e-05
        %v1869 = vrsqrt.pop %v1868
        %v1870 = vmul.f32 %v1869, %v1868
        %v1871 = vmul.f32 %v1870, %v1869
        %v1872 = vmul.f32 0.5, %v1871
        %v1873 = vsub.f32 1.5, %v1872
        %v1874 = vmul.f32 %v1869, %v1873
        %vm1875 = vweird.f32 %v1868
        %vm1876 = vweird.f32 %v1869
        %vm1877 = vmor %vm1875, %vm1876
        %v1878 = vsel %vm1877, %v1869, %v1874
        %v1879 = vmul.f32 %v1862, %v1878
        %v1881 = vperm.slane %v1856, 0
        %v1883 = vmul.f32 %v1879, %v1881
        %v1885 = vperm.slane %v1857, 0
        %v1887 = vadd.f32 %v1883, %v1885
        %1888 = vst.msk [vmem:[%s720] sm:$0xff] %vm762, %v1887
        %s1889 = sand.u32 %s521, 1
        %s1890 = scalar_lea.sflag [#allocation3], %s1889
        %s1891 = sand.u32 %s521, 1
        %s1892 = smul.addr %s1891, 8
        %s1893 = scalar_lea.vmem [#allocation2], %s1892
        %s1894 = sand.u32 %s547, 1
        %s1895 = scalar_lea.sflag [#allocation5], %s1894
        %s1896 = sand.u32 %s547, 1
        %s1897 = smul.addr %s1896, 8
        %s1898 = scalar_lea.vmem [#allocation4], %s1897
        // Predicated region
        $region109: #{tpu_custom_call.1} parent=107 // pred_check
          %p1899 = pneg %p531
        $region110: #{tpu_custom_call.1} parent=107 // pred_check_branch
          %1901 = sbr.rel (%p1899) target = $region112
        $region111: #{tpu_custom_call.1} parent=107 // pred_region
          %1903 = vsyncadd %s1890, 0
          %s1904 = smul.addr %s41, 8
          %s1905 = scalar_lea.hbm %s22, %s1904
          %s1907 = sshll.u32 %s1893, 4
          %s1908 = int_to_ptr.vmem [resolvable:$true] %s1907
          %s1909 = sshll.u32 %s1905, 4
          %s1910 = int_to_ptr.hbm [resolvable:$true] %s1909
          %1912 = dma.vmem_to_hbm [thread:$0]  %s1908, 128, %s1910, %s1890
        $region112: #{tpu_custom_call.1} parent=107 // pred_fallthru
          _
        // Predicated region
        $region113: #{tpu_custom_call.1} parent=107 // pred_check
          %p1913 = pneg %p557
        $region114: #{tpu_custom_call.1} parent=107 // pred_check_branch
          %1915 = sbr.rel (%p1913) target = $region116
        $region115: #{tpu_custom_call.1} parent=107 // pred_region
          %1917 = vsyncadd %s1895, 0
          %s1918 = smul.addr %s41, 8
          %s1919 = scalar_lea.hbm %s23, %s1918
          %s1921 = sshll.u32 %s1898, 4
          %s1922 = int_to_ptr.vmem [resolvable:$true] %s1921
          %s1923 = sshll.u32 %s1919, 4
          %s1924 = int_to_ptr.hbm [resolvable:$true] %s1923
          %1926 = dma.vmem_to_hbm [thread:$0]  %s1922, 128, %s1924, %s1895
        $region116: #{tpu_custom_call.1} parent=107 // pred_fallthru
          _
      $region108: #{tpu_custom_call.1} parent=5 // pred_fallthru
        _
      %p1927 = scmp.le.s32.totalorder 2, %s36
      // Predicated region
      $region117: #{tpu_custom_call.1} parent=5 // pred_check
        %p1928 = pneg %p1927
      $region118: #{tpu_custom_call.1} parent=5 // pred_check_branch
        %1930 = sbr.rel (%p1928) target = $region120
      $region119: #{tpu_custom_call.1} parent=5 // pred_region
        %s1931 = ssub.s32 %s36, 2
        // Predicated region
        $region121: #{tpu_custom_call.1} parent=119 // pred_check
          %p1932 = pneg %p537
        $region122: #{tpu_custom_call.1} parent=119 // pred_check_branch
          %1934 = sbr.rel (%p1932) target = $region124
        $region123: #{tpu_custom_call.1} parent=119 // pred_region
          %s1935 = sand.u32 %s522, 1
          %s1936 = scalar_lea.sflag [#allocation3], %s1935
          %s1937 = sand.u32 %s522, 1
          %s1938 = smul.addr %s1937, 8
          %s1939 = scalar_lea.vmem [#allocation2], %s1938
          %1941 = dma.done %s1936, 128
        $region124: #{tpu_custom_call.1} parent=119 // pred_fallthru
          _
        // Predicated region
        $region125: #{tpu_custom_call.1} parent=119 // pred_check
          %p1942 = pneg %p563
        $region126: #{tpu_custom_call.1} parent=119 // pred_check_branch
          %1944 = sbr.rel (%p1942) target = $region128
        $region127: #{tpu_custom_call.1} parent=119 // pred_region
          %s1945 = sand.u32 %s548, 1
          %s1946 = scalar_lea.sflag [#allocation5], %s1945
          %s1947 = sand.u32 %s548, 1
          %s1948 = smul.addr %s1947, 8
          %s1949 = scalar_lea.vmem [#allocation4], %s1948
          %1951 = dma.done %s1946, 128
        $region128: #{tpu_custom_call.1} parent=119 // pred_fallthru
          _
      $region120: #{tpu_custom_call.1} parent=5 // pred_fallthru
        _
    $region6: #{tpu_custom_call.1} parent=1 // loop_footer
      %s40 = sadd.s32 1, %s36
    $region7: #{tpu_custom_call.1} parent=1 // loop_footer_branch
      %35 = sbr.rel target = $region3
    $region8: #{tpu_custom_call.1} parent=1 // loop_exit
      _
    %1952 = vsyncpa [#allocation3], 1
    %s1953 = scalar_lea.sflag [#allocation3], 1
    %1954 = vsyncpa %s1953, 1
    %1955 = vsyncpa [#allocation5], 1
    %s1956 = scalar_lea.sflag [#allocation5], 1
    %1957 = vsyncpa %s1956, 1

</llo_original>
